<compile_context>
chip_gen: v7x
topology: tpu7x:2x2x1
jax: 0.10.0
libtpu: 0.0.40
codegen_flags: <defaults>
</compile_context>

<pallas_src>
import jax
import jax.numpy as jnp
from jax.experimental import pallas as pl
from jax.experimental.pallas import tpu as pltpu

IN_FEATURES = 32   # "in_features" of the module (small example size)
HIDDEN = 356       # fixed by the module definition


def _round_up(n: int, m: int) -> int:
    return ((n + m - 1) // m) * m


def _cdiv(a: int, b: int) -> int:
    return (a + b - 1) // b


def _device_info():
    """(is_v5e, has_two_tensorcores) with a safe fallback."""
    try:
        kind = jax.devices()[0].device_kind.lower()
    except Exception:
        return False, False
    is_v5e = ("v5" in kind) and (("lite" in kind) or ("v5e" in kind))
    two_tc = "v7" in kind          # v7x has 2 TensorCores per chip
    return is_v5e, two_tc


def _auto_tile_b(batch: int, two_cores: bool) -> int:
    """Batch tile: 1 step on single-TC chips, even >=2 equal steps on v7x."""
    b8 = _round_up(max(batch, 8), 8)
    if two_cores and b8 >= 16:
        steps = max(2, _cdiv(b8, 512))
        if steps % 2:
            steps += 1                       # keep both TCs balanced
        return _round_up(_cdiv(b8, steps), 8)
    return min(b8, 1024)                      # single TC: 1 step up to 1024 rows


def _generator_kernel(x_ref, w1_ref, b1_ref, w2_ref, b2_ref, w3_ref, b3_ref,
                      o_ref):
    # Layer 1: Linear + ReLU   (Dropout(0.1) is identity in eval mode)
    # x is already in the compute dtype (cast in the wrapper); accumulate f32.
    h = jnp.dot(x_ref[...], w1_ref[...], preferred_element_type=jnp.float32)
    h = jnp.maximum(h + b1_ref[...], 0.0)

    # Layer 2: Linear + ReLU   (Dropout(0.1) is identity in eval mode)
    h = jnp.dot(h.astype(w2_ref.dtype), w2_ref[...],
                preferred_element_type=jnp.float32)
    h = jnp.maximum(h + b2_ref[...], 0.0)

    # Layer 3: Linear (output projection, lane-dense padded)
    out = jnp.dot(h.astype(w3_ref.dtype), w3_ref[...],
                  preferred_element_type=jnp.float32)
    o_ref[...] = (out + b3_ref[...]).astype(o_ref.dtype)


def _prepare_params(params, in_features, weight_dtype, lane_pad):
    """Zero-pad HIDDEN -> mult of 256 and out-features -> mult of lane_pad.

    Padding is exact: padded biases are 0 (so ReLU(0)=0) and padded rows of
    w2/w3 are 0 (so they contribute nothing).
    """
    w1, b1 = params["w1"], params["b1"].reshape(1, -1)
    w2, b2 = params["w2"], params["b2"].reshape(1, -1)
    w3, b3 = params["w3"], params["b3"].reshape(1, -1)
    F = in_features
    H = w1.shape[1]
    hp = _round_up(H, 256)        # 356 -> 512: 2x256 MXU groups, mult of 128
    fp = _round_up(F, lane_pad)   # 32 -> 256 (v6e/v7x) or 128 (v5e)
    dw = jnp.dtype(weight_dtype)

    w1p = jnp.zeros((F, hp), dw).at[:, :H].set(w1.astype(dw))
    b1p = jnp.zeros((1, hp), jnp.float32).at[:, :H].set(b1.astype(jnp.float32))
    w2p = jnp.zeros((hp, hp), dw).at[:H, :H].set(w2.astype(dw))
    b2p = jnp.zeros((1, hp), jnp.float32).at[:, :H].set(b2.astype(jnp.float32))
    w3p = jnp.zeros((hp, fp), dw).at[:H, :F].set(w3.astype(dw))
    b3p = jnp.zeros((1, fp), jnp.float32).at[:, :F].set(b3.astype(jnp.float32))
    return (w1p, b1p, w2p, b2p, w3p, b3p), hp, fp


def generator_forward(x, params, *, tile_b=None, weight_dtype=jnp.bfloat16):
    """x: (B, F).  params: dict of (in,out) weights + (1,out) biases.

    weight_dtype: jnp.bfloat16 (default, MXU fast path with f32 accumulation
    and f32 bias/ReLU) or jnp.float32 for the exact path.
    tile_b: batch tile; None = auto per TPU generation.
    """
    B, F = x.shape
    out_dtype = x.dtype
    compute_dtype = jnp.dtype(weight_dtype)

    is_v5e, two_cores = _device_info()
    lane_pad = 128 if is_v5e else 256
    (w1p, b1p, w2p, b2p, w3p, b3p), hp, fp = _prepare_params(
        params, F, compute_dtype, lane_pad)

    # --- batch tiling: auto per generation, pad B if ragged (zero rows).
    if tile_b is None:
        tile_b = _auto_tile_b(B, two_cores)
    else:
        tile_b = max(8, _round_up(min(tile_b, _round_up(B, 8)), 8))
    B_pad = _round_up(B, tile_b)

    xc = x.astype(compute_dtype)              # cast in wrapper, not in kernel
    if B_pad != B:
        xc = jnp.pad(xc, ((0, B_pad - B), (0, 0)))
    grid = (B_pad // tile_b,)

    # Weights/biases: whole-array resident, constant index_map => no
    # per-grid-step re-DMA (~0.8 MiB bf16 / ~1.6 MiB f32 total).
    full = lambda arr: pl.BlockSpec(arr.shape, lambda i: (0, 0))

    itemsize = lambda a: jnp.dtype(a.dtype).itemsize
    flops = 2 * B_pad * (F * hp + hp * hp + hp * fp)
    weight_bytes = sum(int(a.size) * itemsize(a)
                       for a in (w1p, b1p, w2p, b2p, w3p, b3p))
    bytes_accessed = (B_pad * F * itemsize(xc) + weight_bytes
                      + B_pad * fp * jnp.dtype(out_dtype).itemsize)

    # Explicit VMEM budget: double-buffered tiles + weights + f32 intermediates
    # (+ headroom).  Keeps a scaled-up HIDDEN honest on v7x's 64 MiB VMEM.
    io_tile_bytes = tile_b * (F * itemsize(xc) + fp * jnp.dtype(out_dtype).itemsize)
    act_bytes = 2 * tile_b * hp * 4
    vmem_limit = int(min(64 << 20,
                         max(8 << 20,
                             2 * (weight_bytes + io_tile_bytes) + act_bytes
                             + (2 << 20))))

    out_padded = pl.pallas_call(
        _generator_kernel,
        out_shape=jax.ShapeDtypeStruct((B_pad, fp), out_dtype),
        grid_spec=pltpu.PrefetchScalarGridSpec(
            num_scalar_prefetch=0,
            grid=grid,
            in_specs=[
                pl.BlockSpec((tile_b, F), lambda i: (i, 0)),   # x tile
                full(w1p), full(b1p),
                full(w2p), full(b2p),
                full(w3p), full(b3p),
            ],
            out_specs=pl.BlockSpec((tile_b, fp), lambda i: (i, 0)),
        ),
        compiler_params=pltpu.CompilerParams(
            dimension_semantics=("parallel",),
            vmem_limit_bytes=vmem_limit),
        cost_estimate=pl.CostEstimate(flops=flops, transcendentals=0,
                                      bytes_accessed=bytes_accessed),
    )(xc, w1p, b1p, w2p, b2p, w3p, b3p)

    # Slice away batch + feature padding (lane-dense store, cheap XLA slice).
    return out_padded[:B, :F]


def init_params(key, in_features=IN_FEATURES, hidden=HIDDEN):
    """Deterministic synthetic init (uniform, roughly PyTorch's fan-in scale)."""
    ks = jax.random.split(key, 6)

    def lin(kw, kb, fan_in, fan_out):
        bound = 1.0 / jnp.sqrt(fan_in)
        w = jax.random.uniform(kw, (fan_in, fan_out), jnp.float32, -bound, bound)
        b = jax.random.uniform(kb, (1, fan_out), jnp.float32, -bound, bound)
        return w, b

    w1, b1 = lin(ks[0], ks[1], in_features, hidden)
    w2, b2 = lin(ks[2], ks[3], hidden, hidden)
    w3, b3 = lin(ks[4], ks[5], hidden, in_features)
    return {"w1": w1, "b1": b1, "w2": w2, "b2": b2, "w3": w3, "b3": b3}


def _reference(x, p):
    h1 = jnp.maximum(x @ p["w1"] + p["b1"], 0.0)
    h2 = jnp.maximum(h1 @ p["w2"] + p["b2"], 0.0)
    return h2 @ p["w3"] + p["b3"]


if __name__ == "__main__":
    key = jax.random.PRNGKey(0)
    k_x, k_p = jax.random.split(key)

    B = 64
    x = jax.random.normal(k_x, (B, IN_FEATURES), jnp.float32)
    params = init_params(k_p)
    ref = _reference(x, params)

    # 1) default bf16-weight path (f32 accumulation, f32 bias/ReLU)
    out = jax.block_until_ready(generator_forward(x, params))
    assert out.shape == (B, IN_FEATURES) and out.dtype == x.dtype
    assert jnp.allclose(out, ref, atol=1e-1, rtol=1e-1), \
        "bf16 mismatch vs reference"

    # 2) ragged / small batch path (tile clamps, batch zero-padded internally)
    out_small = jax.block_until_ready(generator_forward(x[:10], params))
    assert out_small.shape == (10, IN_FEATURES)
    assert jnp.allclose(out_small, ref[:10], atol=1e-1, rtol=1e-1), \
        "small-batch mismatch vs reference"

    # 3) exact f32 opt-in path
    out_f32 = jax.block_until_ready(
        generator_forward(x, params, weight_dtype=jnp.float32))
    assert jnp.allclose(out_f32, ref, atol=1e-4, rtol=1e-4), \
        "f32 mismatch vs reference"

    print("KERNEL_OK")
</pallas_src>

<mosaic_0001>
module attributes {stable_mosaic.version = 11 : i64} {
  func.func @_generator_kernel(%arg0: i32, %arg1: memref<64x32xbf16, #tpu.memory_space<vmem>>, %arg2: memref<32x512xbf16, #tpu.memory_space<vmem>>, %arg3: memref<1x512xf32, #tpu.memory_space<vmem>>, %arg4: memref<512x512xbf16, #tpu.memory_space<vmem>>, %arg5: memref<1x512xf32, #tpu.memory_space<vmem>>, %arg6: memref<512x256xbf16, #tpu.memory_space<vmem>>, %arg7: memref<1x256xf32, #tpu.memory_space<vmem>>, %arg8: memref<64x256xf32, #tpu.memory_space<vmem>>) attributes {dimension_semantics = [#tpu.dimension_semantics<parallel>], iteration_bounds = array<i64: 1>, scalar_prefetch = 0 : i64, scratch_operands = 0 : i64, tpu.core_type = #tpu.core_type<tc>, window_params = [{transform_indices = @transform_0, window_bounds = array<i64: 64, 32>}, {pipeline_mode = #tpu.pipeline_mode<synchronous>, transform_indices = @transform_1, window_bounds = array<i64: 32, 512>}, {pipeline_mode = #tpu.pipeline_mode<synchronous>, transform_indices = @transform_2, window_bounds = array<i64: 1, 512>}, {pipeline_mode = #tpu.pipeline_mode<synchronous>, transform_indices = @transform_3, window_bounds = array<i64: 512, 512>}, {pipeline_mode = #tpu.pipeline_mode<synchronous>, transform_indices = @transform_4, window_bounds = array<i64: 1, 512>}, {pipeline_mode = #tpu.pipeline_mode<synchronous>, transform_indices = @transform_5, window_bounds = array<i64: 512, 256>}, {pipeline_mode = #tpu.pipeline_mode<synchronous>, transform_indices = @transform_6, window_bounds = array<i64: 1, 256>}, {transform_indices = @transform_7, window_bounds = array<i64: 64, 256>}]} {
    %c0 = arith.constant 0 : index
    %c0_0 = arith.constant 0 : index
    %0 = vector.load %arg1[%c0, %c0_0] : memref<64x32xbf16, #tpu.memory_space<vmem>>, vector<64x32xbf16>
    %c0_1 = arith.constant 0 : index
    %c0_2 = arith.constant 0 : index
    %1 = vector.load %arg2[%c0_1, %c0_2] : memref<32x512xbf16, #tpu.memory_space<vmem>>, vector<32x512xbf16>
    %cst = arith.constant dense<0.000000e+00> : vector<64x512xf32>
    %2 = tpu.matmul %0, %1, %cst {dimension_numbers = #tpu.dot_dimension_numbers<[1], [0], [0], [1], [0, 0, 1, 1], [], []>} : vector<64x32xbf16>, vector<32x512xbf16>, vector<64x512xf32> -> vector<64x512xf32>
    %c0_3 = arith.constant 0 : index
    %c0_4 = arith.constant 0 : index
    %3 = vector.load %arg3[%c0_3, %c0_4] : memref<1x512xf32, #tpu.memory_space<vmem>>, vector<1x512xf32>
    %4 = vector.broadcast %3 : vector<1x512xf32> to vector<64x512xf32>
    %5 = arith.addf %2, %4 : vector<64x512xf32>
    %cst_5 = arith.constant 0.000000e+00 : f32
    %6 = vector.broadcast %cst_5 : f32 to vector<64x512xf32>
    %7 = arith.maximumf %5, %6 : vector<64x512xf32>
    %8 = arith.truncf %7 : vector<64x512xf32> to vector<64x512xbf16>
    %c0_6 = arith.constant 0 : index
    %c0_7 = arith.constant 0 : index
    %9 = vector.load %arg4[%c0_6, %c0_7] : memref<512x512xbf16, #tpu.memory_space<vmem>>, vector<512x512xbf16>
    %cst_8 = arith.constant dense<0.000000e+00> : vector<64x512xf32>
    %10 = tpu.matmul %8, %9, %cst_8 {dimension_numbers = #tpu.dot_dimension_numbers<[1], [0], [0], [1], [0, 0, 1, 1], [], []>} : vector<64x512xbf16>, vector<512x512xbf16>, vector<64x512xf32> -> vector<64x512xf32>
    %c0_9 = arith.constant 0 : index
    %c0_10 = arith.constant 0 : index
    %11 = vector.load %arg5[%c0_9, %c0_10] : memref<1x512xf32, #tpu.memory_space<vmem>>, vector<1x512xf32>
    %12 = vector.broadcast %11 : vector<1x512xf32> to vector<64x512xf32>
    %13 = arith.addf %10, %12 : vector<64x512xf32>
    %cst_11 = arith.constant 0.000000e+00 : f32
    %14 = vector.broadcast %cst_11 : f32 to vector<64x512xf32>
    %15 = arith.maximumf %13, %14 : vector<64x512xf32>
    %16 = arith.truncf %15 : vector<64x512xf32> to vector<64x512xbf16>
    %c0_12 = arith.constant 0 : index
    %c0_13 = arith.constant 0 : index
    %17 = vector.load %arg6[%c0_12, %c0_13] : memref<512x256xbf16, #tpu.memory_space<vmem>>, vector<512x256xbf16>
    %cst_14 = arith.constant dense<0.000000e+00> : vector<64x256xf32>
    %18 = tpu.matmul %16, %17, %cst_14 {dimension_numbers = #tpu.dot_dimension_numbers<[1], [0], [0], [1], [0, 0, 1, 1], [], []>} : vector<64x512xbf16>, vector<512x256xbf16>, vector<64x256xf32> -> vector<64x256xf32>
    %c0_15 = arith.constant 0 : index
    %c0_16 = arith.constant 0 : index
    %19 = vector.load %arg7[%c0_15, %c0_16] : memref<1x256xf32, #tpu.memory_space<vmem>>, vector<1x256xf32>
    %20 = vector.broadcast %19 : vector<1x256xf32> to vector<64x256xf32>
    %21 = arith.addf %18, %20 : vector<64x256xf32>
    %c0_17 = arith.constant 0 : index
    %c0_18 = arith.constant 0 : index
    %22 = vector.load %arg8[%c0_17, %c0_18] : memref<64x256xf32, #tpu.memory_space<vmem>>, vector<64x256xf32>
    tpu.vector_store %arg8[%c0_17, %c0_18], %21 {strides = array<i32>} : memref<64x256xf32, #tpu.memory_space<vmem>>, vector<64x256xf32>,
    return
  }
  func.func @transform_0(%arg0: i32) -> (i32, i32) {
    %c0_i32 = arith.constant 0 : i32
    %c0_i32_0 = arith.constant 0 : i32
    return %arg0, %c0_i32 : i32, i32
  }
  func.func @transform_1(%arg0: i32) -> (i32, i32) {
    %c0_i32 = arith.constant 0 : i32
    %c0_i32_0 = arith.constant 0 : i32
    %c0_i32_1 = arith.constant 0 : i32
    return %c0_i32, %c0_i32_0 : i32, i32
  }
  func.func @transform_2(%arg0: i32) -> (i32, i32) {
    %c0_i32 = arith.constant 0 : i32
    %c0_i32_0 = arith.constant 0 : i32
    %c0_i32_1 = arith.constant 0 : i32
    return %c0_i32, %c0_i32_0 : i32, i32
  }
  func.func @transform_3(%arg0: i32) -> (i32, i32) {
    %c0_i32 = arith.constant 0 : i32
    %c0_i32_0 = arith.constant 0 : i32
    %c0_i32_1 = arith.constant 0 : i32
    return %c0_i32, %c0_i32_0 : i32, i32
  }
  func.func @transform_4(%arg0: i32) -> (i32, i32) {
    %c0_i32 = arith.constant 0 : i32
    %c0_i32_0 = arith.constant 0 : i32
    %c0_i32_1 = arith.constant 0 : i32
    return %c0_i32, %c0_i32_0 : i32, i32
  }
  func.func @transform_5(%arg0: i32) -> (i32, i32) {
    %c0_i32 = arith.constant 0 : i32
    %c0_i32_0 = arith.constant 0 : i32
    %c0_i32_1 = arith.constant 0 : i32
    return %c0_i32, %c0_i32_0 : i32, i32
  }
  func.func @transform_6(%arg0: i32) -> (i32, i32) {
    %c0_i32 = arith.constant 0 : i32
    %c0_i32_0 = arith.constant 0 : i32
    %c0_i32_1 = arith.constant 0 : i32
    return %c0_i32, %c0_i32_0 : i32, i32
  }
  func.func @transform_7(%arg0: i32) -> (i32, i32) {
    %c0_i32 = arith.constant 0 : i32
    %c0_i32_0 = arith.constant 0 : i32
    return %arg0, %c0_i32 : i32, i32
  }
}

</mosaic_0001>

<llo_original>
// kernel: tpu_custom_call.1
$region0: #{tpu_custom_call.1}
  #allocation0 [shape = 'u32[]', space=smem, size = 0x4, offset = 0x4, fixed_abs, tag = 'smem constant byte address 0x4 - core index']
  #allocation1 [shape = 'u32[144,128]{1,0:T(1,128)}', space=vmem, size = 0x12000, scoped, tag = 'internal scratch']
  %s0 = inlined_call_operand.vmem [shape: bf16[64,32], index: 0, kind: input, shape index: {}]
  %s1 = inlined_call_operand.hbm [shape: bf16[32,512], index: 1, kind: input, shape index: {}]
  %s2 = inlined_call_operand.vmem [shape: f32[1,512], index: 2, kind: input, shape index: {}]
  %s3 = inlined_call_operand.hbm [shape: bf16[512,512], index: 3, kind: input, shape index: {}]
  %s4 = inlined_call_operand.vmem [shape: f32[1,512], index: 4, kind: input, shape index: {}]
  %s5 = inlined_call_operand.hbm [shape: bf16[512,256], index: 5, kind: input, shape index: {}]
  %s6 = inlined_call_operand.vmem [shape: f32[1,256], index: 6, kind: input, shape index: {}]
  %s7 = inlined_call_operand.hbm [shape: f32[64,256], index: 7, kind: output, shape index: {}]
  %s8 = sld [smem:[#allocation0]]
  $region50: #{tpu_custom_call.1} parent=0
    _
  %s10 = ssub.s32 1, %s8
  %s11 = scalar_select 0, %s10, %s8
  $region1: #{tpu_custom_call.1} parent=0
    #allocation2 [shape = 'u8[32768]{0}', space=vmem, size = 0x8000, scoped, tag = 'input window, operand 1, single buffered']
    #allocation3 [shape = 's32[1]{0}', space=sflag, size = 0x4, scoped, tag = 'scoped memory for tpu_custom_call.1']
    #allocation4 [shape = 's32[1]{0}', space=sflag, size = 0x4, scoped, tag = 'scoped memory for tpu_custom_call.1']
    #allocation5 [shape = 'u8[524288]{0}', space=vmem, size = 0x80000, scoped, tag = 'input window, operand 3, single buffered']
    #allocation6 [shape = 's32[1]{0}', space=sflag, size = 0x4, scoped, tag = 'scoped memory for tpu_custom_call.1']
    #allocation7 [shape = 'u8[262144]{0}', space=vmem, size = 0x40000, scoped, tag = 'input window, operand 5, single buffered']
    #allocation8 [shape = 'u8[65536]{0}', space=vmem, size = 0x10000, scoped, tag = 'output window, operand 0, single buffered']
    %12 = vsyncpa [#allocation3], 0
    %13 = vsyncpa [#allocation6], 0
    %14 = vsyncpa [#allocation4], 0
    // Predicated region
    $region2: #{tpu_custom_call.1} parent=1 // pred_check
      _
    $region3: #{tpu_custom_call.1} parent=1 // pred_check_branch
      %16 = sbr.rel (0) target = $region5
    $region4: #{tpu_custom_call.1} parent=1 // pred_region
      _
    $region5: #{tpu_custom_call.1} parent=1 // pred_fallthru
      _
    // Predicated region
    $region6: #{tpu_custom_call.1} parent=1 // pred_check
      _
    $region7: #{tpu_custom_call.1} parent=1 // pred_check_branch
      %18 = sbr.rel (0) target = $region9
    $region8: #{tpu_custom_call.1} parent=1 // pred_region
      %s20 = ssub.s32 1024, 1024
      %21 = vsyncadd [#allocation3], %s20
      %s22 = sshll.u32 [#allocation2], 4
      %s23 = int_to_ptr.vmem [resolvable:$true] %s22
      %28 = dma.hbm_to_vmem [thread:$0]  %s1, 1024, %s23, [#allocation3], 256, 256, 16
    $region9: #{tpu_custom_call.1} parent=1 // pred_fallthru
      _
    // Predicated region
    $region10: #{tpu_custom_call.1} parent=1 // pred_check
      _
    $region11: #{tpu_custom_call.1} parent=1 // pred_check_branch
      %30 = sbr.rel (0) target = $region13
    $region12: #{tpu_custom_call.1} parent=1 // pred_region
      _
    $region13: #{tpu_custom_call.1} parent=1 // pred_fallthru
      _
    // Predicated region
    $region14: #{tpu_custom_call.1} parent=1 // pred_check
      _
    $region15: #{tpu_custom_call.1} parent=1 // pred_check_branch
      %32 = sbr.rel (0) target = $region17
    $region16: #{tpu_custom_call.1} parent=1 // pred_region
      %s34 = ssub.s32 16384, 16384
      %35 = vsyncadd [#allocation6], %s34
      %s36 = sshll.u32 [#allocation5], 4
      %s37 = int_to_ptr.vmem [resolvable:$true] %s36
      %42 = dma.hbm_to_vmem [thread:$0]  %s3, 16384, %s37, [#allocation6], 256, 256, 16
    $region17: #{tpu_custom_call.1} parent=1 // pred_fallthru
      _
    // Predicated region
    $region18: #{tpu_custom_call.1} parent=1 // pred_check
      _
    $region19: #{tpu_custom_call.1} parent=1 // pred_check_branch
      %44 = sbr.rel (0) target = $region21
    $region20: #{tpu_custom_call.1} parent=1 // pred_region
      _
    $region21: #{tpu_custom_call.1} parent=1 // pred_fallthru
      _
    // Predicated region
    $region22: #{tpu_custom_call.1} parent=1 // pred_check
      _
    $region23: #{tpu_custom_call.1} parent=1 // pred_check_branch
      %46 = sbr.rel (0) target = $region25
    $region24: #{tpu_custom_call.1} parent=1 // pred_region
      %s48 = ssub.s32 8192, 8192
      %49 = vsyncadd [#allocation6], %s48
      %s50 = sshll.u32 [#allocation7], 4
      %s51 = int_to_ptr.vmem [resolvable:$true] %s50
      %56 = dma.hbm_to_vmem [thread:$0]  %s5, 8192, %s51, [#allocation6], 128, 128, 8
    $region25: #{tpu_custom_call.1} parent=1 // pred_fallthru
      _
    // Predicated region
    $region26: #{tpu_custom_call.1} parent=1 // pred_check
      _
    $region27: #{tpu_custom_call.1} parent=1 // pred_check_branch
      %58 = sbr.rel (0) target = $region29
    $region28: #{tpu_custom_call.1} parent=1 // pred_region
      _
    $region29: #{tpu_custom_call.1} parent=1 // pred_fallthru
      _
    // Predicated region
    $region30: #{tpu_custom_call.1} parent=1 // pred_check
      _
    $region31: #{tpu_custom_call.1} parent=1 // pred_check_branch
      %60 = sbr.rel (0) target = $region33
    $region32: #{tpu_custom_call.1} parent=1 // pred_region
      %61 = dma.done [#allocation3], 1024
    $region33: #{tpu_custom_call.1} parent=1 // pred_fallthru
      _
    // Predicated region
    $region34: #{tpu_custom_call.1} parent=1 // pred_check
      _
    $region35: #{tpu_custom_call.1} parent=1 // pred_check_branch
      %63 = sbr.rel (0) target = $region37
    $region36: #{tpu_custom_call.1} parent=1 // pred_region
      %64 = dma.done [#allocation6], 16384
    $region37: #{tpu_custom_call.1} parent=1 // pred_fallthru
      _
    // Predicated region
    $region38: #{tpu_custom_call.1} parent=1 // pred_check
      _
    $region39: #{tpu_custom_call.1} parent=1 // pred_check_branch
      %66 = sbr.rel (0) target = $region41
    $region40: #{tpu_custom_call.1} parent=1 // pred_region
      %67 = dma.done [#allocation6], 8192
    $region41: #{tpu_custom_call.1} parent=1 // pred_fallthru
      _
    %v69 = vld [vmem:[%s0] sm:$0xf]
    %v70 = vld [vmem:[%s0 + $0x4] sm:$0xf]
    %v71 = vld [vmem:[%s0 + $0x8] sm:$0xf]
    %v72 = vld [vmem:[%s0 + $0xc] sm:$0xf]
    %v73 = vld [vmem:[%s0 + $0x10] sm:$0xf]
    %v74 = vld [vmem:[%s0 + $0x14] sm:$0xf]
    %v75 = vld [vmem:[%s0 + $0x18] sm:$0xf]
    %v76 = vld [vmem:[%s0 + $0x1c] sm:$0xf]
    %v77 = vld [vmem:[#allocation2] sm:$0xff]
    %v78 = vld [vmem:[#allocation2 + $0x8] sm:$0xff]
    %v79 = vld [vmem:[#allocation2 + $0x10] sm:$0xff]
    %v80 = vld [vmem:[#allocation2 + $0x18] sm:$0xff]
    %v81 = vld [vmem:[#allocation2 + $0x20] sm:$0xff]
    %v82 = vld [vmem:[#allocation2 + $0x28] sm:$0xff]
    %v83 = vld [vmem:[#allocation2 + $0x30] sm:$0xff]
    %v84 = vld [vmem:[#allocation2 + $0x38] sm:$0xff]
    %v85 = vld [vmem:[%s2] sm:$0xf]
    %v87 = vlaneseq
    %v88 = vshrl.u32 %v87, 7
    %v89 = vsub.s32 0, %v88
    %v90 = vrot.slane %v85, %v89
    %v91 = vlaneseq
    %v92 = vshrl.u32 %v91, 7
    %v93 = vsub.s32 1, %v92
    %v94 = vrot.slane %v85, %v93
    %v95 = vlaneseq
    %v96 = vshrl.u32 %v95, 7
    %v97 = vsub.s32 2, %v96
    %v98 = vrot.slane %v85, %v97
    %v99 = vlaneseq
    %v100 = vshrl.u32 %v99, 7
    %v101 = vsub.s32 3, %v100
    %v102 = vrot.slane %v85, %v101
    %v115 = vunpack.c.l.b16 %v69
    %v116 = vunpack.c.l.b16 %v70
    %v117 = vunpack.c.l.b16 %v71
    %v118 = vunpack.c.l.b16 %v72
    %v119 = vunpack.c.l.b16 %v73
    %v120 = vunpack.c.l.b16 %v74
    %v121 = vunpack.c.l.b16 %v75
    %v122 = vunpack.c.l.b16 %v76
    %v123 = vpack.c.b16 %v116, %v115
    %v124 = vpack.c.b16 %v118, %v117
    %v125 = vpack.c.b16 %v120, %v119
    %v126 = vpack.c.b16 %v122, %v121
    %v135 = vunpack.c.l.b16 %v77
    %v136 = vunpack.c.h.b16 %v77
    %v137 = vunpack.c.l.b16 %v78
    %v138 = vunpack.c.h.b16 %v78
    %v139 = vunpack.c.l.b16 %v79
    %v140 = vunpack.c.h.b16 %v79
    %v141 = vunpack.c.l.b16 %v80
    %v142 = vunpack.c.h.b16 %v80
    %v143 = vunpack.c.l.b16 %v81
    %v144 = vunpack.c.h.b16 %v81
    %v145 = vunpack.c.l.b16 %v82
    %v146 = vunpack.c.h.b16 %v82
    %v147 = vunpack.c.l.b16 %v83
    %v148 = vunpack.c.h.b16 %v83
    %v149 = vunpack.c.l.b16 %v84
    %v150 = vunpack.c.h.b16 %v84
    %v151 = vpack.c.b16 %v139, %v135
    %v152 = vpack.c.b16 %v140, %v136
    %v153 = vpack.c.b16 %v141, %v137
    %v154 = vpack.c.b16 %v142, %v138
    %v155 = vpack.c.b16 %v147, %v143
    %v156 = vpack.c.b16 %v148, %v144
    %v157 = vpack.c.b16 %v149, %v145
    %v158 = vpack.c.b16 %v150, %v146
    %vm167 = vcmask 261120
    %v169 = vsel %vm167, %v123, 0
    %v172 = vsel %vm167, %v124, 0
    %v175 = vsel %vm167, %v125, 0
    %v178 = vsel %vm167, %v126, 0
    %180 = vmatprep.subr.bf16.mxu0 %v152
    %181 = vmatpush1.bf16.msra.mxu0 %v151
    %182 = vmatprep.subr.bf16.mxu0 %v156
    %183 = vmatpush1.bf16.msra.mxu0 %v155
    %184 = vmatprep.subr.bf16.mxu0 0
    %185 = vmatpush1.bf16.msra.mxu0 0
    %186 = vmatprep.subr.bf16.mxu0 0
    %187 = vmatpush1.bf16.msra.mxu0 0
    %188 = vmatprep.subr.bf16.mxu0 0
    %189 = vmatpush1.bf16.msra.mxu0 0
    %190 = vmatprep.subr.bf16.mxu0 0
    %191 = vmatpush1.bf16.msra.mxu0 0
    %192 = vmatprep.subr.bf16.mxu0 0
    %193 = vmatpush1.bf16.msra.mxu0 0
    %194 = vmatprep.subr.bf16.mxu0 0
    %195 = vmatpush1.bf16.msra.mxu0 0
    %196 = vmatprep.subr.bf16.mxu0 0
    %197 = vmatpush1.bf16.msra.mxu0 0
    %198 = vmatprep.subr.bf16.mxu0 0
    %199 = vmatpush1.bf16.msra.mxu0 0
    %200 = vmatprep.subr.bf16.mxu0 0
    %201 = vmatpush1.bf16.msra.mxu0 0
    %202 = vmatprep.subr.bf16.mxu0 0
    %203 = vmatpush1.bf16.msra.mxu0 0
    %204 = vmatprep.subr.bf16.mxu0 0
    %205 = vmatpush1.bf16.msra.mxu0 0
    %206 = vmatprep.subr.bf16.mxu0 0
    %207 = vmatpush1.bf16.msra.mxu0 0
    %208 = vmatprep.subr.bf16.mxu0 0
    %209 = vmatpush1.bf16.msra.mxu0 0
    %210 = vmatprep.subr.bf16.mxu0 0
    %211 = vmatpush1.bf16.msra.mxu0 0
    %212 = vmatprep.mubr.bf16.mxu0 0
    %213 = vmatmul.mubr.bf16.gmra.mrb[0].mxu0 %v169
    %v214 = vpop.f32.mrb[0].mxu0
    %v215 = vadd.f32 %v90, %v214
    %v216 = vpop.f32.mrb[0].mxu0
    %v217 = vadd.f32 %v94, %v216
    %v218 = vpop.f32.mrb[0].mxu0
    %v219 = vadd.f32 %v90, %v218
    %v220 = vpop.f32.mrb[0].mxu0
    %v221 = vadd.f32 %v94, %v220
    %222 = vmatprep.mubr.bf16.mxu0 0
    %223 = vmatmul.mubr.bf16.gmra.mrb[0].mxu0 %v172
    %v224 = vpop.f32.mrb[0].mxu0
    %v225 = vadd.f32 %v90, %v224
    %v226 = vpop.f32.mrb[0].mxu0
    %v227 = vadd.f32 %v94, %v226
    %v228 = vpop.f32.mrb[0].mxu0
    %v229 = vadd.f32 %v90, %v228
    %v230 = vpop.f32.mrb[0].mxu0
    %v231 = vadd.f32 %v94, %v230
    %232 = vmatprep.mubr.bf16.mxu0 0
    %233 = vmatmul.mubr.bf16.gmra.mrb[0].mxu0 %v175
    %v234 = vpop.f32.mrb[0].mxu0
    %v235 = vadd.f32 %v90, %v234
    %v236 = vpop.f32.mrb[0].mxu0
    %v237 = vadd.f32 %v94, %v236
    %v238 = vpop.f32.mrb[0].mxu0
    %v239 = vadd.f32 %v90, %v238
    %v240 = vpop.f32.mrb[0].mxu0
    %v241 = vadd.f32 %v94, %v240
    %242 = vmatprep.mubr.bf16.mxu0 0
    %243 = vmatmul.mubr.bf16.gmra.mrb[0].mxu0 %v178
    %v244 = vpop.f32.mrb[0].mxu0
    %v245 = vadd.f32 %v90, %v244
    %v246 = vpop.f32.mrb[0].mxu0
    %v247 = vadd.f32 %v94, %v246
    %v248 = vpop.f32.mrb[0].mxu0
    %v249 = vadd.f32 %v90, %v248
    %v250 = vpop.f32.mrb[0].mxu0
    %v251 = vadd.f32 %v94, %v250
    %252 = vdwg.mxu0
    %253 = vmatprep.subr.bf16.mxu0 %v154
    %254 = vmatpush1.bf16.msra.mxu0 %v153
    %255 = vmatprep.subr.bf16.mxu0 %v158
    %256 = vmatpush1.bf16.msra.mxu0 %v157
    %257 = vmatprep.subr.bf16.mxu0 0
    %258 = vmatpush1.bf16.msra.mxu0 0
    %259 = vmatprep.subr.bf16.mxu0 0
    %260 = vmatpush1.bf16.msra.mxu0 0
    %261 = vmatprep.subr.bf16.mxu0 0
    %262 = vmatpush1.bf16.msra.mxu0 0
    %263 = vmatprep.subr.bf16.mxu0 0
    %264 = vmatpush1.bf16.msra.mxu0 0
    %265 = vmatprep.subr.bf16.mxu0 0
    %266 = vmatpush1.bf16.msra.mxu0 0
    %267 = vmatprep.subr.bf16.mxu0 0
    %268 = vmatpush1.bf16.msra.mxu0 0
    %269 = vmatprep.subr.bf16.mxu0 0
    %270 = vmatpush1.bf16.msra.mxu0 0
    %271 = vmatprep.subr.bf16.mxu0 0
    %272 = vmatpush1.bf16.msra.mxu0 0
    %273 = vmatprep.subr.bf16.mxu0 0
    %274 = vmatpush1.bf16.msra.mxu0 0
    %275 = vmatprep.subr.bf16.mxu0 0
    %276 = vmatpush1.bf16.msra.mxu0 0
    %277 = vmatprep.subr.bf16.mxu0 0
    %278 = vmatpush1.bf16.msra.mxu0 0
    %279 = vmatprep.subr.bf16.mxu0 0
    %280 = vmatpush1.bf16.msra.mxu0 0
    %281 = vmatprep.subr.bf16.mxu0 0
    %282 = vmatpush1.bf16.msra.mxu0 0
    %283 = vmatprep.subr.bf16.mxu0 0
    %284 = vmatpush1.bf16.msra.mxu0 0
    %285 = vmatprep.mubr.bf16.mxu0 0
    %286 = vmatmul.mubr.bf16.gmra.mrb[0].mxu0 %v169
    %v287 = vpop.f32.mrb[0].mxu0
    %v288 = vadd.f32 %v98, %v287
    %v289 = vpop.f32.mrb[0].mxu0
    %v290 = vadd.f32 %v102, %v289
    %v291 = vpop.f32.mrb[0].mxu0
    %v292 = vadd.f32 %v98, %v291
    %v293 = vpop.f32.mrb[0].mxu0
    %v294 = vadd.f32 %v102, %v293
    %295 = vmatprep.mubr.bf16.mxu0 0
    %296 = vmatmul.mubr.bf16.gmra.mrb[0].mxu0 %v172
    %v297 = vpop.f32.mrb[0].mxu0
    %v298 = vadd.f32 %v98, %v297
    %v299 = vpop.f32.mrb[0].mxu0
    %v300 = vadd.f32 %v102, %v299
    %v301 = vpop.f32.mrb[0].mxu0
    %v302 = vadd.f32 %v98, %v301
    %v303 = vpop.f32.mrb[0].mxu0
    %v304 = vadd.f32 %v102, %v303
    %305 = vmatprep.mubr.bf16.mxu0 0
    %306 = vmatmul.mubr.bf16.gmra.mrb[0].mxu0 %v175
    %v307 = vpop.f32.mrb[0].mxu0
    %v308 = vadd.f32 %v98, %v307
    %v309 = vpop.f32.mrb[0].mxu0
    %v310 = vadd.f32 %v102, %v309
    %v311 = vpop.f32.mrb[0].mxu0
    %v312 = vadd.f32 %v98, %v311
    %v313 = vpop.f32.mrb[0].mxu0
    %v314 = vadd.f32 %v102, %v313
    %315 = vmatprep.mubr.bf16.mxu0 0
    %316 = vmatmul.mubr.bf16.gmra.mrb[0].mxu0 %v178
    %v317 = vpop.f32.mrb[0].mxu0
    %v318 = vadd.f32 %v98, %v317
    %v319 = vpop.f32.mrb[0].mxu0
    %v320 = vadd.f32 %v102, %v319
    %v321 = vpop.f32.mrb[0].mxu0
    %v322 = vadd.f32 %v98, %v321
    %v323 = vpop.f32.mrb[0].mxu0
    %v324 = vadd.f32 %v102, %v323
    %325 = vdwg.mxu0
    %v326 = vmax.f32 %v215, 0.0
    %v327 = vmax.f32 %v217, 0.0
    %v328 = vmax.f32 %v288, 0.0
    %v329 = vmax.f32 %v290, 0.0
    %v330 = vmax.f32 %v219, 0.0
    %v331 = vmax.f32 %v221, 0.0
    %v332 = vmax.f32 %v292, 0.0
    %v333 = vmax.f32 %v294, 0.0
    %v334 = vmax.f32 %v225, 0.0
    %v335 = vmax.f32 %v227, 0.0
    %v336 = vmax.f32 %v298, 0.0
    %v337 = vmax.f32 %v300, 0.0
    %v338 = vmax.f32 %v229, 0.0
    %v339 = vmax.f32 %v231, 0.0
    %v340 = vmax.f32 %v302, 0.0
    %v341 = vmax.f32 %v304, 0.0
    %v342 = vmax.f32 %v235, 0.0
    %v343 = vmax.f32 %v237, 0.0
    %v344 = vmax.f32 %v308, 0.0
    %v345 = vmax.f32 %v310, 0.0
    %v346 = vmax.f32 %v239, 0.0
    %v347 = vmax.f32 %v241, 0.0
    %v348 = vmax.f32 %v312, 0.0
    %v349 = vmax.f32 %v314, 0.0
    %v350 = vmax.f32 %v245, 0.0
    %v351 = vmax.f32 %v247, 0.0
    %v352 = vmax.f32 %v318, 0.0
    %v353 = vmax.f32 %v320, 0.0
    %v354 = vmax.f32 %v249, 0.0
    %v355 = vmax.f32 %v251, 0.0
    %v356 = vmax.f32 %v322, 0.0
    %v357 = vmax.f32 %v324, 0.0
    %v358 = vpack.c.bf16 %v330, %v326
    %v359 = vpack.c.bf16 %v331, %v327
    %v360 = vpack.c.bf16 %v332, %v328
    %v361 = vpack.c.bf16 %v333, %v329
    %v362 = vpack.c.bf16 %v338, %v334
    %v363 = vpack.c.bf16 %v339, %v335
    %v364 = vpack.c.bf16 %v340, %v336
    %v365 = vpack.c.bf16 %v341, %v337
    %v366 = vpack.c.bf16 %v346, %v342
    %v367 = vpack.c.bf16 %v347, %v343
    %v368 = vpack.c.bf16 %v348, %v344
    %v369 = vpack.c.bf16 %v349, %v345
    %v370 = vpack.c.bf16 %v354, %v350
    %v371 = vpack.c.bf16 %v355, %v351
    %v372 = vpack.c.bf16 %v356, %v352
    %v373 = vpack.c.bf16 %v357, %v353
    %v374 = vld [vmem:[#allocation5] sm:$0xff]
    %v375 = vld [vmem:[#allocation5 + $0x8] sm:$0xff]
    %v376 = vld [vmem:[#allocation5 + $0x10] sm:$0xff]
    %v377 = vld [vmem:[#allocation5 + $0x18] sm:$0xff]
    %v378 = vld [vmem:[#allocation5 + $0x20] sm:$0xff]
    %v379 = vld [vmem:[#allocation5 + $0x28] sm:$0xff]
    %v380 = vld [vmem:[#allocation5 + $0x30] sm:$0xff]
    %v381 = vld [vmem:[#allocation5 + $0x38] sm:$0xff]
    %v382 = vld [vmem:[#allocation5 + $0x40] sm:$0xff]
    %v383 = vld [vmem:[#allocation5 + $0x48] sm:$0xff]
    %v384 = vld [vmem:[#allocation5 + $0x50] sm:$0xff]
    %v385 = vld [vmem:[#allocation5 + $0x58] sm:$0xff]
    %v386 = vld [vmem:[#allocation5 + $0x60] sm:$0xff]
    %v387 = vld [vmem:[#allocation5 + $0x68] sm:$0xff]
    %v388 = vld [vmem:[#allocation5 + $0x70] sm:$0xff]
    %v389 = vld [vmem:[#allocation5 + $0x78] sm:$0xff]
    %v390 = vld [vmem:[#allocation5 + $0x80] sm:$0xff]
    %v391 = vld [vmem:[#allocation5 + $0x88] sm:$0xff]
    %v392 = vld [vmem:[#allocation5 + $0x90] sm:$0xff]
    %v393 = vld [vmem:[#allocation5 + $0x98] sm:$0xff]
    %v394 = vld [vmem:[#allocation5 + $0xa0] sm:$0xff]
    %v395 = vld [vmem:[#allocation5 + $0xa8] sm:$0xff]
    %v396 = vld [vmem:[#allocation5 + $0xb0] sm:$0xff]
    %v397 = vld [vmem:[#allocation5 + $0xb8] sm:$0xff]
    %v398 = vld [vmem:[#allocation5 + $0xc0] sm:$0xff]
    %v399 = vld [vmem:[#allocation5 + $0xc8] sm:$0xff]
    %v400 = vld [vmem:[#allocation5 + $0xd0] sm:$0xff]
    %v401 = vld [vmem:[#allocation5 + $0xd8] sm:$0xff]
    %v402 = vld [vmem:[#allocation5 + $0xe0] sm:$0xff]
    %v403 = vld [vmem:[#allocation5 + $0xe8] sm:$0xff]
    %v404 = vld [vmem:[#allocation5 + $0xf0] sm:$0xff]
    %v405 = vld [vmem:[#allocation5 + $0xf8] sm:$0xff]
    %v406 = vld [vmem:[#allocation5 + $0x100] sm:$0xff]
    %v407 = vld [vmem:[#allocation5 + $0x108] sm:$0xff]
    %v408 = vld [vmem:[#allocation5 + $0x110] sm:$0xff]
    %v409 = vld [vmem:[#allocation5 + $0x118] sm:$0xff]
    %v410 = vld [vmem:[#allocation5 + $0x120] sm:$0xff]
    %v411 = vld [vmem:[#allocation5 + $0x128] sm:$0xff]
    %v412 = vld [vmem:[#allocation5 + $0x130] sm:$0xff]
    %v413 = vld [vmem:[#allocation5 + $0x138] sm:$0xff]
    %v414 = vld [vmem:[#allocation5 + $0x140] sm:$0xff]
    %v415 = vld [vmem:[#allocation5 + $0x148] sm:$0xff]
    %v416 = vld [vmem:[#allocation5 + $0x150] sm:$0xff]
    %v417 = vld [vmem:[#allocation5 + $0x158] sm:$0xff]
    %v418 = vld [vmem:[#allocation5 + $0x160] sm:$0xff]
    %v419 = vld [vmem:[#allocation5 + $0x168] sm:$0xff]
    %v420 = vld [vmem:[#allocation5 + $0x170] sm:$0xff]
    %v421 = vld [vmem:[#allocation5 + $0x178] sm:$0xff]
    %v422 = vld [vmem:[#allocation5 + $0x180] sm:$0xff]
    %v423 = vld [vmem:[#allocation5 + $0x188] sm:$0xff]
    %v424 = vld [vmem:[#allocation5 + $0x190] sm:$0xff]
    %v425 = vld [vmem:[#allocation5 + $0x198] sm:$0xff]
    %v426 = vld [vmem:[#allocation5 + $0x1a0] sm:$0xff]
    %v427 = vld [vmem:[#allocation5 + $0x1a8] sm:$0xff]
    %v428 = vld [vmem:[#allocation5 + $0x1b0] sm:$0xff]
    %v429 = vld [vmem:[#allocation5 + $0x1b8] sm:$0xff]
    %v430 = vld [vmem:[#allocation5 + $0x1c0] sm:$0xff]
    %v431 = vld [vmem:[#allocation5 + $0x1c8] sm:$0xff]
    %v432 = vld [vmem:[#allocation5 + $0x1d0] sm:$0xff]
    %v433 = vld [vmem:[#allocation5 + $0x1d8] sm:$0xff]
    %v434 = vld [vmem:[#allocation5 + $0x1e0] sm:$0xff]
    %v435 = vld [vmem:[#allocation5 + $0x1e8] sm:$0xff]
    %v436 = vld [vmem:[#allocation5 + $0x1f0] sm:$0xff]
    %v437 = vld [vmem:[#allocation5 + $0x1f8] sm:$0xff]
    %v438 = vld [vmem:[#allocation5 + $0x200] sm:$0xff]
    %v439 = vld [vmem:[#allocation5 + $0x208] sm:$0xff]
    %v440 = vld [vmem:[#allocation5 + $0x210] sm:$0xff]
    %v441 = vld [vmem:[#allocation5 + $0x218] sm:$0xff]
    %v442 = vld [vmem:[#allocation5 + $0x220] sm:$0xff]
    %v443 = vld [vmem:[#allocation5 + $0x228] sm:$0xff]
    %v444 = vld [vmem:[#allocation5 + $0x230] sm:$0xff]
    %v445 = vld [vmem:[#allocation5 + $0x238] sm:$0xff]
    %v446 = vld [vmem:[#allocation5 + $0x240] sm:$0xff]
    %v447 = vld [vmem:[#allocation5 + $0x248] sm:$0xff]
    %v448 = vld [vmem:[#allocation5 + $0x250] sm:$0xff]
    %v449 = vld [vmem:[#allocation5 + $0x258] sm:$0xff]
    %v450 = vld [vmem:[#allocation5 + $0x260] sm:$0xff]
    %v451 = vld [vmem:[#allocation5 + $0x268] sm:$0xff]
    %v452 = vld [vmem:[#allocation5 + $0x270] sm:$0xff]
    %v453 = vld [vmem:[#allocation5 + $0x278] sm:$0xff]
    %v454 = vld [vmem:[#allocation5 + $0x280] sm:$0xff]
    %v455 = vld [vmem:[#allocation5 + $0x288] sm:$0xff]
    %v456 = vld [vmem:[#allocation5 + $0x290] sm:$0xff]
    %v457 = vld [vmem:[#allocation5 + $0x298] sm:$0xff]
    %v458 = vld [vmem:[#allocation5 + $0x2a0] sm:$0xff]
    %v459 = vld [vmem:[#allocation5 + $0x2a8] sm:$0xff]
    %v460 = vld [vmem:[#allocation5 + $0x2b0] sm:$0xff]
    %v461 = vld [vmem:[#allocation5 + $0x2b8] sm:$0xff]
    %v462 = vld [vmem:[#allocation5 + $0x2c0] sm:$0xff]
    %v463 = vld [vmem:[#allocation5 + $0x2c8] sm:$0xff]
    %v464 = vld [vmem:[#allocation5 + $0x2d0] sm:$0xff]
    %v465 = vld [vmem:[#allocation5 + $0x2d8] sm:$0xff]
    %v466 = vld [vmem:[#allocation5 + $0x2e0] sm:$0xff]
    %v467 = vld [vmem:[#allocation5 + $0x2e8] sm:$0xff]
    %v468 = vld [vmem:[#allocation5 + $0x2f0] sm:$0xff]
    %v469 = vld [vmem:[#allocation5 + $0x2f8] sm:$0xff]
    %v470 = vld [vmem:[#allocation5 + $0x300] sm:$0xff]
    %v471 = vld [vmem:[#allocation5 + $0x308] sm:$0xff]
    %v472 = vld [vmem:[#allocation5 + $0x310] sm:$0xff]
    %v473 = vld [vmem:[#allocation5 + $0x318] sm:$0xff]
    %v474 = vld [vmem:[#allocation5 + $0x320] sm:$0xff]
    %v475 = vld [vmem:[#allocation5 + $0x328] sm:$0xff]
    %v476 = vld [vmem:[#allocation5 + $0x330] sm:$0xff]
    %v477 = vld [vmem:[#allocation5 + $0x338] sm:$0xff]
    %v478 = vld [vmem:[#allocation5 + $0x340] sm:$0xff]
    %v479 = vld [vmem:[#allocation5 + $0x348] sm:$0xff]
    %v480 = vld [vmem:[#allocation5 + $0x350] sm:$0xff]
    %v481 = vld [vmem:[#allocation5 + $0x358] sm:$0xff]
    %v482 = vld [vmem:[#allocation5 + $0x360] sm:$0xff]
    %v483 = vld [vmem:[#allocation5 + $0x368] sm:$0xff]
    %v484 = vld [vmem:[#allocation5 + $0x370] sm:$0xff]
    %v485 = vld [vmem:[#allocation5 + $0x378] sm:$0xff]
    %v486 = vld [vmem:[#allocation5 + $0x380] sm:$0xff]
    %v487 = vld [vmem:[#allocation5 + $0x388] sm:$0xff]
    %v488 = vld [vmem:[#allocation5 + $0x390] sm:$0xff]
    %v489 = vld [vmem:[#allocation5 + $0x398] sm:$0xff]
    %v490 = vld [vmem:[#allocation5 + $0x3a0] sm:$0xff]
    %v491 = vld [vmem:[#allocation5 + $0x3a8] sm:$0xff]
    %v492 = vld [vmem:[#allocation5 + $0x3b0] sm:$0xff]
    %v493 = vld [vmem:[#allocation5 + $0x3b8] sm:$0xff]
    %v494 = vld [vmem:[#allocation5 + $0x3c0] sm:$0xff]
    %v495 = vld [vmem:[#allocation5 + $0x3c8] sm:$0xff]
    %v496 = vld [vmem:[#allocation5 + $0x3d0] sm:$0xff]
    %v497 = vld [vmem:[#allocation5 + $0x3d8] sm:$0xff]
    %v498 = vld [vmem:[#allocation5 + $0x3e0] sm:$0xff]
    %v499 = vld [vmem:[#allocation5 + $0x3e8] sm:$0xff]
    %v500 = vld [vmem:[#allocation5 + $0x3f0] sm:$0xff]
    %v501 = vld [vmem:[#allocation5 + $0x3f8] sm:$0xff]
    %v502 = vld [vmem:[%s4] sm:$0xf]
    %v504 = vlaneseq
    %v505 = vshrl.u32 %v504, 7
    %v506 = vsub.s32 0, %v505
    %v507 = vrot.slane %v502, %v506
    %v508 = vlaneseq
    %v509 = vshrl.u32 %v508, 7
    %v510 = vsub.s32 1, %v509
    %v511 = vrot.slane %v502, %v510
    %v512 = vlaneseq
    %v513 = vshrl.u32 %v512, 7
    %v514 = vsub.s32 2, %v513
    %v515 = vrot.slane %v502, %v514
    %v516 = vlaneseq
    %v517 = vshrl.u32 %v516, 7
    %v518 = vsub.s32 3, %v517
    %v519 = vrot.slane %v502, %v518
    %v652 = vunpack.c.l.b16 %v374
    %v653 = vunpack.c.h.b16 %v374
    %v654 = vunpack.c.l.b16 %v375
    %v655 = vunpack.c.h.b16 %v375
    %v656 = vunpack.c.l.b16 %v376
    %v657 = vunpack.c.h.b16 %v376
    %v658 = vunpack.c.l.b16 %v377
    %v659 = vunpack.c.h.b16 %v377
    %v660 = vunpack.c.l.b16 %v378
    %v661 = vunpack.c.h.b16 %v378
    %v662 = vunpack.c.l.b16 %v379
    %v663 = vunpack.c.h.b16 %v379
    %v664 = vunpack.c.l.b16 %v380
    %v665 = vunpack.c.h.b16 %v380
    %v666 = vunpack.c.l.b16 %v381
    %v667 = vunpack.c.h.b16 %v381
    %v668 = vunpack.c.l.b16 %v382
    %v669 = vunpack.c.h.b16 %v382
    %v670 = vunpack.c.l.b16 %v383
    %v671 = vunpack.c.h.b16 %v383
    %v672 = vunpack.c.l.b16 %v384
    %v673 = vunpack.c.h.b16 %v384
    %v674 = vunpack.c.l.b16 %v385
    %v675 = vunpack.c.h.b16 %v385
    %v676 = vunpack.c.l.b16 %v386
    %v677 = vunpack.c.h.b16 %v386
    %v678 = vunpack.c.l.b16 %v387
    %v679 = vunpack.c.h.b16 %v387
    %v680 = vunpack.c.l.b16 %v388
    %v681 = vunpack.c.h.b16 %v388
    %v682 = vunpack.c.l.b16 %v389
    %v683 = vunpack.c.h.b16 %v389
    %v684 = vunpack.c.l.b16 %v390
    %v685 = vunpack.c.h.b16 %v390
    %v686 = vunpack.c.l.b16 %v391
    %v687 = vunpack.c.h.b16 %v391
    %v688 = vunpack.c.l.b16 %v392
    %v689 = vunpack.c.h.b16 %v392
    %v690 = vunpack.c.l.b16 %v393
    %v691 = vunpack.c.h.b16 %v393
    %v692 = vunpack.c.l.b16 %v394
    %v693 = vunpack.c.h.b16 %v394
    %v694 = vunpack.c.l.b16 %v395
    %v695 = vunpack.c.h.b16 %v395
    %v696 = vunpack.c.l.b16 %v396
    %v697 = vunpack.c.h.b16 %v396
    %v698 = vunpack.c.l.b16 %v397
    %v699 = vunpack.c.h.b16 %v397
    %v700 = vunpack.c.l.b16 %v398
    %v701 = vunpack.c.h.b16 %v398
    %v702 = vunpack.c.l.b16 %v399
    %v703 = vunpack.c.h.b16 %v399
    %v704 = vunpack.c.l.b16 %v400
    %v705 = vunpack.c.h.b16 %v400
    %v706 = vunpack.c.l.b16 %v401
    %v707 = vunpack.c.h.b16 %v401
    %v708 = vunpack.c.l.b16 %v402
    %v709 = vunpack.c.h.b16 %v402
    %v710 = vunpack.c.l.b16 %v403
    %v711 = vunpack.c.h.b16 %v403
    %v712 = vunpack.c.l.b16 %v404
    %v713 = vunpack.c.h.b16 %v404
    %v714 = vunpack.c.l.b16 %v405
    %v715 = vunpack.c.h.b16 %v405
    %v716 = vunpack.c.l.b16 %v406
    %v717 = vunpack.c.h.b16 %v406
    %v718 = vunpack.c.l.b16 %v407
    %v719 = vunpack.c.h.b16 %v407
    %v720 = vunpack.c.l.b16 %v408
    %v721 = vunpack.c.h.b16 %v408
    %v722 = vunpack.c.l.b16 %v409
    %v723 = vunpack.c.h.b16 %v409
    %v724 = vunpack.c.l.b16 %v410
    %v725 = vunpack.c.h.b16 %v410
    %v726 = vunpack.c.l.b16 %v411
    %v727 = vunpack.c.h.b16 %v411
    %v728 = vunpack.c.l.b16 %v412
    %v729 = vunpack.c.h.b16 %v412
    %v730 = vunpack.c.l.b16 %v413
    %v731 = vunpack.c.h.b16 %v413
    %v732 = vunpack.c.l.b16 %v414
    %v733 = vunpack.c.h.b16 %v414
    %v734 = vunpack.c.l.b16 %v415
    %v735 = vunpack.c.h.b16 %v415
    %v736 = vunpack.c.l.b16 %v416
    %v737 = vunpack.c.h.b16 %v416
    %v738 = vunpack.c.l.b16 %v417
    %v739 = vunpack.c.h.b16 %v417
    %v740 = vunpack.c.l.b16 %v418
    %v741 = vunpack.c.h.b16 %v418
    %v742 = vunpack.c.l.b16 %v419
    %v743 = vunpack.c.h.b16 %v419
    %v744 = vunpack.c.l.b16 %v420
    %v745 = vunpack.c.h.b16 %v420
    %v746 = vunpack.c.l.b16 %v421
    %v747 = vunpack.c.h.b16 %v421
    %v748 = vunpack.c.l.b16 %v422
    %v749 = vunpack.c.h.b16 %v422
    %v750 = vunpack.c.l.b16 %v423
    %v751 = vunpack.c.h.b16 %v423
    %v752 = vunpack.c.l.b16 %v424
    %v753 = vunpack.c.h.b16 %v424
    %v754 = vunpack.c.l.b16 %v425
    %v755 = vunpack.c.h.b16 %v425
    %v756 = vunpack.c.l.b16 %v426
    %v757 = vunpack.c.h.b16 %v426
    %v758 = vunpack.c.l.b16 %v427
    %v759 = vunpack.c.h.b16 %v427
    %v760 = vunpack.c.l.b16 %v428
    %v761 = vunpack.c.h.b16 %v428
    %v762 = vunpack.c.l.b16 %v429
    %v763 = vunpack.c.h.b16 %v429
    %v764 = vunpack.c.l.b16 %v430
    %v765 = vunpack.c.h.b16 %v430
    %v766 = vunpack.c.l.b16 %v431
    %v767 = vunpack.c.h.b16 %v431
    %v768 = vunpack.c.l.b16 %v432
    %v769 = vunpack.c.h.b16 %v432
    %v770 = vunpack.c.l.b16 %v433
    %v771 = vunpack.c.h.b16 %v433
    %v772 = vunpack.c.l.b16 %v434
    %v773 = vunpack.c.h.b16 %v434
    %v774 = vunpack.c.l.b16 %v435
    %v775 = vunpack.c.h.b16 %v435
    %v776 = vunpack.c.l.b16 %v436
    %v777 = vunpack.c.h.b16 %v436
    %v778 = vunpack.c.l.b16 %v437
    %v779 = vunpack.c.h.b16 %v437
    %v780 = vunpack.c.l.b16 %v438
    %v781 = vunpack.c.h.b16 %v438
    %v782 = vunpack.c.l.b16 %v439
    %v783 = vunpack.c.h.b16 %v439
    %v784 = vunpack.c.l.b16 %v440
    %v785 = vunpack.c.h.b16 %v440
    %v786 = vunpack.c.l.b16 %v441
    %v787 = vunpack.c.h.b16 %v441
    %v788 = vunpack.c.l.b16 %v442
    %v789 = vunpack.c.h.b16 %v442
    %v790 = vunpack.c.l.b16 %v443
    %v791 = vunpack.c.h.b16 %v443
    %v792 = vunpack.c.l.b16 %v444
    %v793 = vunpack.c.h.b16 %v444
    %v794 = vunpack.c.l.b16 %v445
    %v795 = vunpack.c.h.b16 %v445
    %v796 = vunpack.c.l.b16 %v446
    %v797 = vunpack.c.h.b16 %v446
    %v798 = vunpack.c.l.b16 %v447
    %v799 = vunpack.c.h.b16 %v447
    %v800 = vunpack.c.l.b16 %v448
    %v801 = vunpack.c.h.b16 %v448
    %v802 = vunpack.c.l.b16 %v449
    %v803 = vunpack.c.h.b16 %v449
    %v804 = vunpack.c.l.b16 %v450
    %v805 = vunpack.c.h.b16 %v450
    %v806 = vunpack.c.l.b16 %v451
    %v807 = vunpack.c.h.b16 %v451
    %v808 = vunpack.c.l.b16 %v452
    %v809 = vunpack.c.h.b16 %v452
    %v810 = vunpack.c.l.b16 %v453
    %v811 = vunpack.c.h.b16 %v453
    %v812 = vunpack.c.l.b16 %v454
    %v813 = vunpack.c.h.b16 %v454
    %v814 = vunpack.c.l.b16 %v455
    %v815 = vunpack.c.h.b16 %v455
    %v816 = vunpack.c.l.b16 %v456
    %v817 = vunpack.c.h.b16 %v456
    %v818 = vunpack.c.l.b16 %v457
    %v819 = vunpack.c.h.b16 %v457
    %v820 = vunpack.c.l.b16 %v458
    %v821 = vunpack.c.h.b16 %v458
    %v822 = vunpack.c.l.b16 %v459
    %v823 = vunpack.c.h.b16 %v459
    %v824 = vunpack.c.l.b16 %v460
    %v825 = vunpack.c.h.b16 %v460
    %v826 = vunpack.c.l.b16 %v461
    %v827 = vunpack.c.h.b16 %v461
    %v828 = vunpack.c.l.b16 %v462
    %v829 = vunpack.c.h.b16 %v462
    %v830 = vunpack.c.l.b16 %v463
    %v831 = vunpack.c.h.b16 %v463
    %v832 = vunpack.c.l.b16 %v464
    %v833 = vunpack.c.h.b16 %v464
    %v834 = vunpack.c.l.b16 %v465
    %v835 = vunpack.c.h.b16 %v465
    %v836 = vunpack.c.l.b16 %v466
    %v837 = vunpack.c.h.b16 %v466
    %v838 = vunpack.c.l.b16 %v467
    %v839 = vunpack.c.h.b16 %v467
    %v840 = vunpack.c.l.b16 %v468
    %v841 = vunpack.c.h.b16 %v468
    %v842 = vunpack.c.l.b16 %v469
    %v843 = vunpack.c.h.b16 %v469
    %v844 = vunpack.c.l.b16 %v470
    %v845 = vunpack.c.h.b16 %v470
    %v846 = vunpack.c.l.b16 %v471
    %v847 = vunpack.c.h.b16 %v471
    %v848 = vunpack.c.l.b16 %v472
    %v849 = vunpack.c.h.b16 %v472
    %v850 = vunpack.c.l.b16 %v473
    %v851 = vunpack.c.h.b16 %v473
    %v852 = vunpack.c.l.b16 %v474
    %v853 = vunpack.c.h.b16 %v474
    %v854 = vunpack.c.l.b16 %v475
    %v855 = vunpack.c.h.b16 %v475
    %v856 = vunpack.c.l.b16 %v476
    %v857 = vunpack.c.h.b16 %v476
    %v858 = vunpack.c.l.b16 %v477
    %v859 = vunpack.c.h.b16 %v477
    %v860 = vunpack.c.l.b16 %v478
    %v861 = vunpack.c.h.b16 %v478
    %v862 = vunpack.c.l.b16 %v479
    %v863 = vunpack.c.h.b16 %v479
    %v864 = vunpack.c.l.b16 %v480
    %v865 = vunpack.c.h.b16 %v480
    %v866 = vunpack.c.l.b16 %v481
    %v867 = vunpack.c.h.b16 %v481
    %v868 = vunpack.c.l.b16 %v482
    %v869 = vunpack.c.h.b16 %v482
    %v870 = vunpack.c.l.b16 %v483
    %v871 = vunpack.c.h.b16 %v483
    %v872 = vunpack.c.l.b16 %v484
    %v873 = vunpack.c.h.b16 %v484
    %v874 = vunpack.c.l.b16 %v485
    %v875 = vunpack.c.h.b16 %v485
    %v876 = vunpack.c.l.b16 %v486
    %v877 = vunpack.c.h.b16 %v486
    %v878 = vunpack.c.l.b16 %v487
    %v879 = vunpack.c.h.b16 %v487
    %v880 = vunpack.c.l.b16 %v488
    %v881 = vunpack.c.h.b16 %v488
    %v882 = vunpack.c.l.b16 %v489
    %v883 = vunpack.c.h.b16 %v489
    %v884 = vunpack.c.l.b16 %v490
    %v885 = vunpack.c.h.b16 %v490
    %v886 = vunpack.c.l.b16 %v491
    %v887 = vunpack.c.h.b16 %v491
    %v888 = vunpack.c.l.b16 %v492
    %v889 = vunpack.c.h.b16 %v492
    %v890 = vunpack.c.l.b16 %v493
    %v891 = vunpack.c.h.b16 %v493
    %v892 = vunpack.c.l.b16 %v494
    %v893 = vunpack.c.h.b16 %v494
    %v894 = vunpack.c.l.b16 %v495
    %v895 = vunpack.c.h.b16 %v495
    %v896 = vunpack.c.l.b16 %v496
    %v897 = vunpack.c.h.b16 %v496
    %v898 = vunpack.c.l.b16 %v497
    %v899 = vunpack.c.h.b16 %v497
    %v900 = vunpack.c.l.b16 %v498
    %v901 = vunpack.c.h.b16 %v498
    %v902 = vunpack.c.l.b16 %v499
    %v903 = vunpack.c.h.b16 %v499
    %v904 = vunpack.c.l.b16 %v500
    %v905 = vunpack.c.h.b16 %v500
    %v906 = vunpack.c.l.b16 %v501
    %v907 = vunpack.c.h.b16 %v501
    %v908 = vpack.c.b16 %v656, %v652
    %v909 = vpack.c.b16 %v657, %v653
    %v910 = vpack.c.b16 %v658, %v654
    %v911 = vpack.c.b16 %v659, %v655
    %v912 = vpack.c.b16 %v664, %v660
    %v913 = vpack.c.b16 %v665, %v661
    %v914 = vpack.c.b16 %v666, %v662
    %v915 = vpack.c.b16 %v667, %v663
    %v916 = vpack.c.b16 %v672, %v668
    %v917 = vpack.c.b16 %v673, %v669
    %v918 = vpack.c.b16 %v674, %v670
    %v919 = vpack.c.b16 %v675, %v671
    %v920 = vpack.c.b16 %v680, %v676
    %v921 = vpack.c.b16 %v681, %v677
    %v922 = vpack.c.b16 %v682, %v678
    %v923 = vpack.c.b16 %v683, %v679
    %v924 = vpack.c.b16 %v688, %v684
    %v925 = vpack.c.b16 %v689, %v685
    %v926 = vpack.c.b16 %v690, %v686
    %v927 = vpack.c.b16 %v691, %v687
    %v928 = vpack.c.b16 %v696, %v692
    %v929 = vpack.c.b16 %v697, %v693
    %v930 = vpack.c.b16 %v698, %v694
    %v931 = vpack.c.b16 %v699, %v695
    %v932 = vpack.c.b16 %v704, %v700
    %v933 = vpack.c.b16 %v705, %v701
    %v934 = vpack.c.b16 %v706, %v702
    %v935 = vpack.c.b16 %v707, %v703
    %v936 = vpack.c.b16 %v712, %v708
    %v937 = vpack.c.b16 %v713, %v709
    %v938 = vpack.c.b16 %v714, %v710
    %v939 = vpack.c.b16 %v715, %v711
    %v940 = vpack.c.b16 %v720, %v716
    %v941 = vpack.c.b16 %v721, %v717
    %v942 = vpack.c.b16 %v722, %v718
    %v943 = vpack.c.b16 %v723, %v719
    %v944 = vpack.c.b16 %v728, %v724
    %v945 = vpack.c.b16 %v729, %v725
    %v946 = vpack.c.b16 %v730, %v726
    %v947 = vpack.c.b16 %v731, %v727
    %v948 = vpack.c.b16 %v736, %v732
    %v949 = vpack.c.b16 %v737, %v733
    %v950 = vpack.c.b16 %v738, %v734
    %v951 = vpack.c.b16 %v739, %v735
    %v952 = vpack.c.b16 %v744, %v740
    %v953 = vpack.c.b16 %v745, %v741
    %v954 = vpack.c.b16 %v746, %v742
    %v955 = vpack.c.b16 %v747, %v743
    %v956 = vpack.c.b16 %v752, %v748
    %v957 = vpack.c.b16 %v753, %v749
    %v958 = vpack.c.b16 %v754, %v750
    %v959 = vpack.c.b16 %v755, %v751
    %v960 = vpack.c.b16 %v760, %v756
    %v961 = vpack.c.b16 %v761, %v757
    %v962 = vpack.c.b16 %v762, %v758
    %v963 = vpack.c.b16 %v763, %v759
    %v964 = vpack.c.b16 %v768, %v764
    %v965 = vpack.c.b16 %v769, %v765
    %v966 = vpack.c.b16 %v770, %v766
    %v967 = vpack.c.b16 %v771, %v767
    %v968 = vpack.c.b16 %v776, %v772
    %v969 = vpack.c.b16 %v777, %v773
    %v970 = vpack.c.b16 %v778, %v774
    %v971 = vpack.c.b16 %v779, %v775
    %v972 = vpack.c.b16 %v784, %v780
    %v973 = vpack.c.b16 %v785, %v781
    %v974 = vpack.c.b16 %v786, %v782
    %v975 = vpack.c.b16 %v787, %v783
    %v976 = vpack.c.b16 %v792, %v788
    %v977 = vpack.c.b16 %v793, %v789
    %v978 = vpack.c.b16 %v794, %v790
    %v979 = vpack.c.b16 %v795, %v791
    %v980 = vpack.c.b16 %v800, %v796
    %v981 = vpack.c.b16 %v801, %v797
    %v982 = vpack.c.b16 %v802, %v798
    %v983 = vpack.c.b16 %v803, %v799
    %v984 = vpack.c.b16 %v808, %v804
    %v985 = vpack.c.b16 %v809, %v805
    %v986 = vpack.c.b16 %v810, %v806
    %v987 = vpack.c.b16 %v811, %v807
    %v988 = vpack.c.b16 %v816, %v812
    %v989 = vpack.c.b16 %v817, %v813
    %v990 = vpack.c.b16 %v818, %v814
    %v991 = vpack.c.b16 %v819, %v815
    %v992 = vpack.c.b16 %v824, %v820
    %v993 = vpack.c.b16 %v825, %v821
    %v994 = vpack.c.b16 %v826, %v822
    %v995 = vpack.c.b16 %v827, %v823
    %v996 = vpack.c.b16 %v832, %v828
    %v997 = vpack.c.b16 %v833, %v829
    %v998 = vpack.c.b16 %v834, %v830
    %v999 = vpack.c.b16 %v835, %v831
    %v1000 = vpack.c.b16 %v840, %v836
    %v1001 = vpack.c.b16 %v841, %v837
    %v1002 = vpack.c.b16 %v842, %v838
    %v1003 = vpack.c.b16 %v843, %v839
    %v1004 = vpack.c.b16 %v848, %v844
    %v1005 = vpack.c.b16 %v849, %v845
    %v1006 = vpack.c.b16 %v850, %v846
    %v1007 = vpack.c.b16 %v851, %v847
    %v1008 = vpack.c.b16 %v856, %v852
    %v1009 = vpack.c.b16 %v857, %v853
    %v1010 = vpack.c.b16 %v858, %v854
    %v1011 = vpack.c.b16 %v859, %v855
    %v1012 = vpack.c.b16 %v864, %v860
    %v1013 = vpack.c.b16 %v865, %v861
    %v1014 = vpack.c.b16 %v866, %v862
    %v1015 = vpack.c.b16 %v867, %v863
    %v1016 = vpack.c.b16 %v872, %v868
    %v1017 = vpack.c.b16 %v873, %v869
    %v1018 = vpack.c.b16 %v874, %v870
    %v1019 = vpack.c.b16 %v875, %v871
    %v1020 = vpack.c.b16 %v880, %v876
    %v1021 = vpack.c.b16 %v881, %v877
    %v1022 = vpack.c.b16 %v882, %v878
    %v1023 = vpack.c.b16 %v883, %v879
    %v1024 = vpack.c.b16 %v888, %v884
    %v1025 = vpack.c.b16 %v889, %v885
    %v1026 = vpack.c.b16 %v890, %v886
    %v1027 = vpack.c.b16 %v891, %v887
    %v1028 = vpack.c.b16 %v896, %v892
    %v1029 = vpack.c.b16 %v897, %v893
    %v1030 = vpack.c.b16 %v898, %v894
    %v1031 = vpack.c.b16 %v899, %v895
    %v1032 = vpack.c.b16 %v904, %v900
    %v1033 = vpack.c.b16 %v905, %v901
    %v1034 = vpack.c.b16 %v906, %v902
    %v1035 = vpack.c.b16 %v907, %v903
    %1164 = vmatprep.subr.bf16.mxu0 %v909
    %1165 = vmatpush1.bf16.msra.mxu0 %v908
    %1166 = vmatprep.subr.bf16.mxu0 %v913
    %1167 = vmatpush1.bf16.msra.mxu0 %v912
    %1168 = vmatprep.subr.bf16.mxu0 %v917
    %1169 = vmatpush1.bf16.msra.mxu0 %v916
    %1170 = vmatprep.subr.bf16.mxu0 %v921
    %1171 = vmatpush1.bf16.msra.mxu0 %v920
    %1172 = vmatprep.subr.bf16.mxu0 %v925
    %1173 = vmatpush1.bf16.msra.mxu0 %v924
    %1174 = vmatprep.subr.bf16.mxu0 %v929
    %1175 = vmatpush1.bf16.msra.mxu0 %v928
    %1176 = vmatprep.subr.bf16.mxu0 %v933
    %1177 = vmatpush1.bf16.msra.mxu0 %v932
    %1178 = vmatprep.subr.bf16.mxu0 %v937
    %1179 = vmatpush1.bf16.msra.mxu0 %v936
    %1180 = vmatprep.subr.bf16.mxu0 %v941
    %1181 = vmatpush1.bf16.msra.mxu0 %v940
    %1182 = vmatprep.subr.bf16.mxu0 %v945
    %1183 = vmatpush1.bf16.msra.mxu0 %v944
    %1184 = vmatprep.subr.bf16.mxu0 %v949
    %1185 = vmatpush1.bf16.msra.mxu0 %v948
    %1186 = vmatprep.subr.bf16.mxu0 %v953
    %1187 = vmatpush1.bf16.msra.mxu0 %v952
    %1188 = vmatprep.subr.bf16.mxu0 %v957
    %1189 = vmatpush1.bf16.msra.mxu0 %v956
    %1190 = vmatprep.subr.bf16.mxu0 %v961
    %1191 = vmatpush1.bf16.msra.mxu0 %v960
    %1192 = vmatprep.subr.bf16.mxu0 %v965
    %1193 = vmatpush1.bf16.msra.mxu0 %v964
    %1194 = vmatprep.subr.bf16.mxu0 %v969
    %1195 = vmatpush1.bf16.msra.mxu0 %v968
    %1196 = vmatprep.mubr.bf16.mxu0 %v359
    %1197 = vmatmul.mubr.bf16.gmra.mrb[0].mxu0 %v358
    %v1198 = vpop.f32.mrb[0].mxu0
    %v1199 = vadd.f32 %v507, %v1198
    %v1200 = vpop.f32.mrb[0].mxu0
    %v1201 = vadd.f32 %v511, %v1200
    %v1202 = vpop.f32.mrb[0].mxu0
    %v1203 = vadd.f32 %v507, %v1202
    %v1204 = vpop.f32.mrb[0].mxu0
    %v1205 = vadd.f32 %v511, %v1204
    %1206 = vmatprep.mubr.bf16.mxu0 %v363
    %1207 = vmatmul.mubr.bf16.gmra.mrb[0].mxu0 %v362
    %v1208 = vpop.f32.mrb[0].mxu0
    %v1209 = vadd.f32 %v507, %v1208
    %v1210 = vpop.f32.mrb[0].mxu0
    %v1211 = vadd.f32 %v511, %v1210
    %v1212 = vpop.f32.mrb[0].mxu0
    %v1213 = vadd.f32 %v507, %v1212
    %v1214 = vpop.f32.mrb[0].mxu0
    %v1215 = vadd.f32 %v511, %v1214
    %1216 = vmatprep.mubr.bf16.mxu0 %v367
    %1217 = vmatmul.mubr.bf16.gmra.mrb[0].mxu0 %v366
    %v1218 = vpop.f32.mrb[0].mxu0
    %v1219 = vadd.f32 %v507, %v1218
    %v1220 = vpop.f32.mrb[0].mxu0
    %v1221 = vadd.f32 %v511, %v1220
    %v1222 = vpop.f32.mrb[0].mxu0
    %v1223 = vadd.f32 %v507, %v1222
    %v1224 = vpop.f32.mrb[0].mxu0
    %v1225 = vadd.f32 %v511, %v1224
    %1226 = vmatprep.mubr.bf16.mxu0 %v371
    %1227 = vmatmul.mubr.bf16.gmra.mrb[0].mxu0 %v370
    %v1228 = vpop.f32.mrb[0].mxu0
    %v1229 = vadd.f32 %v507, %v1228
    %v1230 = vpop.f32.mrb[0].mxu0
    %v1231 = vadd.f32 %v511, %v1230
    %v1232 = vpop.f32.mrb[0].mxu0
    %v1233 = vadd.f32 %v507, %v1232
    %v1234 = vpop.f32.mrb[0].mxu0
    %v1235 = vadd.f32 %v511, %v1234
    %1236 = vdwg.mxu0
    %1237 = vmatprep.subr.bf16.mxu0 %v973
    %1238 = vmatpush1.bf16.msra.mxu0 %v972
    %1239 = vmatprep.subr.bf16.mxu0 %v977
    %1240 = vmatpush1.bf16.msra.mxu0 %v976
    %1241 = vmatprep.subr.bf16.mxu0 %v981
    %1242 = vmatpush1.bf16.msra.mxu0 %v980
    %1243 = vmatprep.subr.bf16.mxu0 %v985
    %1244 = vmatpush1.bf16.msra.mxu0 %v984
    %1245 = vmatprep.subr.bf16.mxu0 %v989
    %1246 = vmatpush1.bf16.msra.mxu0 %v988
    %1247 = vmatprep.subr.bf16.mxu0 %v993
    %1248 = vmatpush1.bf16.msra.mxu0 %v992
    %1249 = vmatprep.subr.bf16.mxu0 %v997
    %1250 = vmatpush1.bf16.msra.mxu0 %v996
    %1251 = vmatprep.subr.bf16.mxu0 %v1001
    %1252 = vmatpush1.bf16.msra.mxu0 %v1000
    %1253 = vmatprep.subr.bf16.mxu0 %v1005
    %1254 = vmatpush1.bf16.msra.mxu0 %v1004
    %1255 = vmatprep.subr.bf16.mxu0 %v1009
    %1256 = vmatpush1.bf16.msra.mxu0 %v1008
    %1257 = vmatprep.subr.bf16.mxu0 %v1013
    %1258 = vmatpush1.bf16.msra.mxu0 %v1012
    %1259 = vmatprep.subr.bf16.mxu0 %v1017
    %1260 = vmatpush1.bf16.msra.mxu0 %v1016
    %1261 = vmatprep.subr.bf16.mxu0 %v1021
    %1262 = vmatpush1.bf16.msra.mxu0 %v1020
    %1263 = vmatprep.subr.bf16.mxu0 %v1025
    %1264 = vmatpush1.bf16.msra.mxu0 %v1024
    %1265 = vmatprep.subr.bf16.mxu0 %v1029
    %1266 = vmatpush1.bf16.msra.mxu0 %v1028
    %1267 = vmatprep.subr.bf16.mxu0 %v1033
    %1268 = vmatpush1.bf16.msra.mxu0 %v1032
    %1269 = vmatprep.mubr.bf16.mxu0 %v361
    %1270 = vmatmul.mubr.bf16.gmra.mrb[0].mxu0 %v360
    %v1271 = vpop.f32.mrb[0].mxu0
    %v1272 = vadd.f32 %v1199, %v1271
    %v1273 = vpop.f32.mrb[0].mxu0
    %v1274 = vadd.f32 %v1201, %v1273
    %v1275 = vpop.f32.mrb[0].mxu0
    %v1276 = vadd.f32 %v1203, %v1275
    %v1277 = vpop.f32.mrb[0].mxu0
    %v1278 = vadd.f32 %v1205, %v1277
    %1279 = vmatprep.mubr.bf16.mxu0 %v365
    %1280 = vmatmul.mubr.bf16.gmra.mrb[0].mxu0 %v364
    %v1281 = vpop.f32.mrb[0].mxu0
    %v1282 = vadd.f32 %v1209, %v1281
    %v1283 = vpop.f32.mrb[0].mxu0
    %v1284 = vadd.f32 %v1211, %v1283
    %v1285 = vpop.f32.mrb[0].mxu0
    %v1286 = vadd.f32 %v1213, %v1285
    %v1287 = vpop.f32.mrb[0].mxu0
    %v1288 = vadd.f32 %v1215, %v1287
    %1289 = vmatprep.mubr.bf16.mxu0 %v369
    %1290 = vmatmul.mubr.bf16.gmra.mrb[0].mxu0 %v368
    %v1291 = vpop.f32.mrb[0].mxu0
    %v1292 = vadd.f32 %v1219, %v1291
    %v1293 = vpop.f32.mrb[0].mxu0
    %v1294 = vadd.f32 %v1221, %v1293
    %v1295 = vpop.f32.mrb[0].mxu0
    %v1296 = vadd.f32 %v1223, %v1295
    %v1297 = vpop.f32.mrb[0].mxu0
    %v1298 = vadd.f32 %v1225, %v1297
    %1299 = vmatprep.mubr.bf16.mxu0 %v373
    %1300 = vmatmul.mubr.bf16.gmra.mrb[0].mxu0 %v372
    %v1301 = vpop.f32.mrb[0].mxu0
    %v1302 = vadd.f32 %v1229, %v1301
    %v1303 = vpop.f32.mrb[0].mxu0
    %v1304 = vadd.f32 %v1231, %v1303
    %v1305 = vpop.f32.mrb[0].mxu0
    %v1306 = vadd.f32 %v1233, %v1305
    %v1307 = vpop.f32.mrb[0].mxu0
    %v1308 = vadd.f32 %v1235, %v1307
    %1309 = vdwg.mxu0
    %1310 = vmatprep.subr.bf16.mxu0 %v911
    %1311 = vmatpush1.bf16.msra.mxu0 %v910
    %1312 = vmatprep.subr.bf16.mxu0 %v915
    %1313 = vmatpush1.bf16.msra.mxu0 %v914
    %1314 = vmatprep.subr.bf16.mxu0 %v919
    %1315 = vmatpush1.bf16.msra.mxu0 %v918
    %1316 = vmatprep.subr.bf16.mxu0 %v923
    %1317 = vmatpush1.bf16.msra.mxu0 %v922
    %1318 = vmatprep.subr.bf16.mxu0 %v927
    %1319 = vmatpush1.bf16.msra.mxu0 %v926
    %1320 = vmatprep.subr.bf16.mxu0 %v931
    %1321 = vmatpush1.bf16.msra.mxu0 %v930
    %1322 = vmatprep.subr.bf16.mxu0 %v935
    %1323 = vmatpush1.bf16.msra.mxu0 %v934
    %1324 = vmatprep.subr.bf16.mxu0 %v939
    %1325 = vmatpush1.bf16.msra.mxu0 %v938
    %1326 = vmatprep.subr.bf16.mxu0 %v943
    %1327 = vmatpush1.bf16.msra.mxu0 %v942
    %1328 = vmatprep.subr.bf16.mxu0 %v947
    %1329 = vmatpush1.bf16.msra.mxu0 %v946
    %1330 = vmatprep.subr.bf16.mxu0 %v951
    %1331 = vmatpush1.bf16.msra.mxu0 %v950
    %1332 = vmatprep.subr.bf16.mxu0 %v955
    %1333 = vmatpush1.bf16.msra.mxu0 %v954
    %1334 = vmatprep.subr.bf16.mxu0 %v959
    %1335 = vmatpush1.bf16.msra.mxu0 %v958
    %1336 = vmatprep.subr.bf16.mxu0 %v963
    %1337 = vmatpush1.bf16.msra.mxu0 %v962
    %1338 = vmatprep.subr.bf16.mxu0 %v967
    %1339 = vmatpush1.bf16.msra.mxu0 %v966
    %1340 = vmatprep.subr.bf16.mxu0 %v971
    %1341 = vmatpush1.bf16.msra.mxu0 %v970
    %1342 = vmatprep.mubr.bf16.mxu0 %v359
    %1343 = vmatmul.mubr.bf16.gmra.mrb[0].mxu0 %v358
    %v1344 = vpop.f32.mrb[0].mxu0
    %v1345 = vadd.f32 %v515, %v1344
    %v1346 = vpop.f32.mrb[0].mxu0
    %v1347 = vadd.f32 %v519, %v1346
    %v1348 = vpop.f32.mrb[0].mxu0
    %v1349 = vadd.f32 %v515, %v1348
    %v1350 = vpop.f32.mrb[0].mxu0
    %v1351 = vadd.f32 %v519, %v1350
    %1352 = vmatprep.mubr.bf16.mxu0 %v363
    %1353 = vmatmul.mubr.bf16.gmra.mrb[0].mxu0 %v362
    %v1354 = vpop.f32.mrb[0].mxu0
    %v1355 = vadd.f32 %v515, %v1354
    %v1356 = vpop.f32.mrb[0].mxu0
    %v1357 = vadd.f32 %v519, %v1356
    %v1358 = vpop.f32.mrb[0].mxu0
    %v1359 = vadd.f32 %v515, %v1358
    %v1360 = vpop.f32.mrb[0].mxu0
    %v1361 = vadd.f32 %v519, %v1360
    %1362 = vmatprep.mubr.bf16.mxu0 %v367
    %1363 = vmatmul.mubr.bf16.gmra.mrb[0].mxu0 %v366
    %v1364 = vpop.f32.mrb[0].mxu0
    %v1365 = vadd.f32 %v515, %v1364
    %v1366 = vpop.f32.mrb[0].mxu0
    %v1367 = vadd.f32 %v519, %v1366
    %v1368 = vpop.f32.mrb[0].mxu0
    %v1369 = vadd.f32 %v515, %v1368
    %v1370 = vpop.f32.mrb[0].mxu0
    %v1371 = vadd.f32 %v519, %v1370
    %1372 = vmatprep.mubr.bf16.mxu0 %v371
    %1373 = vmatmul.mubr.bf16.gmra.mrb[0].mxu0 %v370
    %v1374 = vpop.f32.mrb[0].mxu0
    %v1375 = vadd.f32 %v515, %v1374
    %v1376 = vpop.f32.mrb[0].mxu0
    %v1377 = vadd.f32 %v519, %v1376
    %v1378 = vpop.f32.mrb[0].mxu0
    %v1379 = vadd.f32 %v515, %v1378
    %v1380 = vpop.f32.mrb[0].mxu0
    %v1381 = vadd.f32 %v519, %v1380
    %1382 = vdwg.mxu0
    %1383 = vmatprep.subr.bf16.mxu0 %v975
    %1384 = vmatpush1.bf16.msra.mxu0 %v974
    %1385 = vmatprep.subr.bf16.mxu0 %v979
    %1386 = vmatpush1.bf16.msra.mxu0 %v978
    %1387 = vmatprep.subr.bf16.mxu0 %v983
    %1388 = vmatpush1.bf16.msra.mxu0 %v982
    %1389 = vmatprep.subr.bf16.mxu0 %v987
    %1390 = vmatpush1.bf16.msra.mxu0 %v986
    %1391 = vmatprep.subr.bf16.mxu0 %v991
    %1392 = vmatpush1.bf16.msra.mxu0 %v990
    %1393 = vmatprep.subr.bf16.mxu0 %v995
    %1394 = vmatpush1.bf16.msra.mxu0 %v994
    %1395 = vmatprep.subr.bf16.mxu0 %v999
    %1396 = vmatpush1.bf16.msra.mxu0 %v998
    %1397 = vmatprep.subr.bf16.mxu0 %v1003
    %1398 = vmatpush1.bf16.msra.mxu0 %v1002
    %1399 = vmatprep.subr.bf16.mxu0 %v1007
    %1400 = vmatpush1.bf16.msra.mxu0 %v1006
    %1401 = vmatprep.subr.bf16.mxu0 %v1011
    %1402 = vmatpush1.bf16.msra.mxu0 %v1010
    %1403 = vmatprep.subr.bf16.mxu0 %v1015
    %1404 = vmatpush1.bf16.msra.mxu0 %v1014
    %1405 = vmatprep.subr.bf16.mxu0 %v1019
    %1406 = vmatpush1.bf16.msra.mxu0 %v1018
    %1407 = vmatprep.subr.bf16.mxu0 %v1023
    %1408 = vmatpush1.bf16.msra.mxu0 %v1022
    %1409 = vmatprep.subr.bf16.mxu0 %v1027
    %1410 = vmatpush1.bf16.msra.mxu0 %v1026
    %1411 = vmatprep.subr.bf16.mxu0 %v1031
    %1412 = vmatpush1.bf16.msra.mxu0 %v1030
    %1413 = vmatprep.subr.bf16.mxu0 %v1035
    %1414 = vmatpush1.bf16.msra.mxu0 %v1034
    %1415 = vmatprep.mubr.bf16.mxu0 %v361
    %1416 = vmatmul.mubr.bf16.gmra.mrb[0].mxu0 %v360
    %v1417 = vpop.f32.mrb[0].mxu0
    %v1418 = vadd.f32 %v1345, %v1417
    %v1419 = vpop.f32.mrb[0].mxu0
    %v1420 = vadd.f32 %v1347, %v1419
    %v1421 = vpop.f32.mrb[0].mxu0
    %v1422 = vadd.f32 %v1349, %v1421
    %v1423 = vpop.f32.mrb[0].mxu0
    %v1424 = vadd.f32 %v1351, %v1423
    %1425 = vmatprep.mubr.bf16.mxu0 %v365
    %1426 = vmatmul.mubr.bf16.gmra.mrb[0].mxu0 %v364
    %v1427 = vpop.f32.mrb[0].mxu0
    %v1428 = vadd.f32 %v1355, %v1427
    %v1429 = vpop.f32.mrb[0].mxu0
    %v1430 = vadd.f32 %v1357, %v1429
    %v1431 = vpop.f32.mrb[0].mxu0
    %v1432 = vadd.f32 %v1359, %v1431
    %v1433 = vpop.f32.mrb[0].mxu0
    %v1434 = vadd.f32 %v1361, %v1433
    %1435 = vmatprep.mubr.bf16.mxu0 %v369
    %1436 = vmatmul.mubr.bf16.gmra.mrb[0].mxu0 %v368
    %v1437 = vpop.f32.mrb[0].mxu0
    %v1438 = vadd.f32 %v1365, %v1437
    %v1439 = vpop.f32.mrb[0].mxu0
    %v1440 = vadd.f32 %v1367, %v1439
    %v1441 = vpop.f32.mrb[0].mxu0
    %v1442 = vadd.f32 %v1369, %v1441
    %v1443 = vpop.f32.mrb[0].mxu0
    %v1444 = vadd.f32 %v1371, %v1443
    %1445 = vmatprep.mubr.bf16.mxu0 %v373
    %1446 = vmatmul.mubr.bf16.gmra.mrb[0].mxu0 %v372
    %v1447 = vpop.f32.mrb[0].mxu0
    %v1448 = vadd.f32 %v1375, %v1447
    %v1449 = vpop.f32.mrb[0].mxu0
    %v1450 = vadd.f32 %v1377, %v1449
    %v1451 = vpop.f32.mrb[0].mxu0
    %v1452 = vadd.f32 %v1379, %v1451
    %v1453 = vpop.f32.mrb[0].mxu0
    %v1454 = vadd.f32 %v1381, %v1453
    %1455 = vdwg.mxu0
    %v1456 = vmax.f32 %v1272, 0.0
    %v1457 = vmax.f32 %v1274, 0.0
    %v1458 = vmax.f32 %v1418, 0.0
    %v1459 = vmax.f32 %v1420, 0.0
    %v1460 = vmax.f32 %v1276, 0.0
    %v1461 = vmax.f32 %v1278, 0.0
    %v1462 = vmax.f32 %v1422, 0.0
    %v1463 = vmax.f32 %v1424, 0.0
    %v1464 = vmax.f32 %v1282, 0.0
    %v1465 = vmax.f32 %v1284, 0.0
    %v1466 = vmax.f32 %v1428, 0.0
    %v1467 = vmax.f32 %v1430, 0.0
    %v1468 = vmax.f32 %v1286, 0.0
    %v1469 = vmax.f32 %v1288, 0.0
    %v1470 = vmax.f32 %v1432, 0.0
    %v1471 = vmax.f32 %v1434, 0.0
    %v1472 = vmax.f32 %v1292, 0.0
    %v1473 = vmax.f32 %v1294, 0.0
    %v1474 = vmax.f32 %v1438, 0.0
    %v1475 = vmax.f32 %v1440, 0.0
    %v1476 = vmax.f32 %v1296, 0.0
    %v1477 = vmax.f32 %v1298, 0.0
    %v1478 = vmax.f32 %v1442, 0.0
    %v1479 = vmax.f32 %v1444, 0.0
    %v1480 = vmax.f32 %v1302, 0.0
    %v1481 = vmax.f32 %v1304, 0.0
    %v1482 = vmax.f32 %v1448, 0.0
    %v1483 = vmax.f32 %v1450, 0.0
    %v1484 = vmax.f32 %v1306, 0.0
    %v1485 = vmax.f32 %v1308, 0.0
    %v1486 = vmax.f32 %v1452, 0.0
    %v1487 = vmax.f32 %v1454, 0.0
    %v1488 = vpack.c.bf16 %v1460, %v1456
    %v1489 = vpack.c.bf16 %v1461, %v1457
    %v1490 = vpack.c.bf16 %v1462, %v1458
    %v1491 = vpack.c.bf16 %v1463, %v1459
    %v1492 = vpack.c.bf16 %v1468, %v1464
    %v1493 = vpack.c.bf16 %v1469, %v1465
    %v1494 = vpack.c.bf16 %v1470, %v1466
    %v1495 = vpack.c.bf16 %v1471, %v1467
    %v1496 = vpack.c.bf16 %v1476, %v1472
    %v1497 = vpack.c.bf16 %v1477, %v1473
    %v1498 = vpack.c.bf16 %v1478, %v1474
    %v1499 = vpack.c.bf16 %v1479, %v1475
    %v1500 = vpack.c.bf16 %v1484, %v1480
    %v1501 = vpack.c.bf16 %v1485, %v1481
    %v1502 = vpack.c.bf16 %v1486, %v1482
    %v1503 = vpack.c.bf16 %v1487, %v1483
    %v1504 = vld [vmem:[#allocation7] sm:$0xff]
    %v1505 = vld [vmem:[#allocation7 + $0x8] sm:$0xff]
    %v1506 = vld [vmem:[#allocation7 + $0x10] sm:$0xff]
    %v1507 = vld [vmem:[#allocation7 + $0x18] sm:$0xff]
    %v1508 = vld [vmem:[#allocation7 + $0x20] sm:$0xff]
    %v1509 = vld [vmem:[#allocation7 + $0x28] sm:$0xff]
    %v1510 = vld [vmem:[#allocation7 + $0x30] sm:$0xff]
    %v1511 = vld [vmem:[#allocation7 + $0x38] sm:$0xff]
    %v1512 = vld [vmem:[#allocation7 + $0x40] sm:$0xff]
    %v1513 = vld [vmem:[#allocation7 + $0x48] sm:$0xff]
    %v1514 = vld [vmem:[#allocation7 + $0x50] sm:$0xff]
    %v1515 = vld [vmem:[#allocation7 + $0x58] sm:$0xff]
    %v1516 = vld [vmem:[#allocation7 + $0x60] sm:$0xff]
    %v1517 = vld [vmem:[#allocation7 + $0x68] sm:$0xff]
    %v1518 = vld [vmem:[#allocation7 + $0x70] sm:$0xff]
    %v1519 = vld [vmem:[#allocation7 + $0x78] sm:$0xff]
    %v1520 = vld [vmem:[#allocation7 + $0x80] sm:$0xff]
    %v1521 = vld [vmem:[#allocation7 + $0x88] sm:$0xff]
    %v1522 = vld [vmem:[#allocation7 + $0x90] sm:$0xff]
    %v1523 = vld [vmem:[#allocation7 + $0x98] sm:$0xff]
    %v1524 = vld [vmem:[#allocation7 + $0xa0] sm:$0xff]
    %v1525 = vld [vmem:[#allocation7 + $0xa8] sm:$0xff]
    %v1526 = vld [vmem:[#allocation7 + $0xb0] sm:$0xff]
    %v1527 = vld [vmem:[#allocation7 + $0xb8] sm:$0xff]
    %v1528 = vld [vmem:[#allocation7 + $0xc0] sm:$0xff]
    %v1529 = vld [vmem:[#allocation7 + $0xc8] sm:$0xff]
    %v1530 = vld [vmem:[#allocation7 + $0xd0] sm:$0xff]
    %v1531 = vld [vmem:[#allocation7 + $0xd8] sm:$0xff]
    %v1532 = vld [vmem:[#allocation7 + $0xe0] sm:$0xff]
    %v1533 = vld [vmem:[#allocation7 + $0xe8] sm:$0xff]
    %v1534 = vld [vmem:[#allocation7 + $0xf0] sm:$0xff]
    %v1535 = vld [vmem:[#allocation7 + $0xf8] sm:$0xff]
    %v1536 = vld [vmem:[#allocation7 + $0x100] sm:$0xff]
    %v1537 = vld [vmem:[#allocation7 + $0x108] sm:$0xff]
    %v1538 = vld [vmem:[#allocation7 + $0x110] sm:$0xff]
    %v1539 = vld [vmem:[#allocation7 + $0x118] sm:$0xff]
    %v1540 = vld [vmem:[#allocation7 + $0x120] sm:$0xff]
    %v1541 = vld [vmem:[#allocation7 + $0x128] sm:$0xff]
    %v1542 = vld [vmem:[#allocation7 + $0x130] sm:$0xff]
    %v1543 = vld [vmem:[#allocation7 + $0x138] sm:$0xff]
    %v1544 = vld [vmem:[#allocation7 + $0x140] sm:$0xff]
    %v1545 = vld [vmem:[#allocation7 + $0x148] sm:$0xff]
    %v1546 = vld [vmem:[#allocation7 + $0x150] sm:$0xff]
    %v1547 = vld [vmem:[#allocation7 + $0x158] sm:$0xff]
    %v1548 = vld [vmem:[#allocation7 + $0x160] sm:$0xff]
    %v1549 = vld [vmem:[#allocation7 + $0x168] sm:$0xff]
    %v1550 = vld [vmem:[#allocation7 + $0x170] sm:$0xff]
    %v1551 = vld [vmem:[#allocation7 + $0x178] sm:$0xff]
    %v1552 = vld [vmem:[#allocation7 + $0x180] sm:$0xff]
    %v1553 = vld [vmem:[#allocation7 + $0x188] sm:$0xff]
    %v1554 = vld [vmem:[#allocation7 + $0x190] sm:$0xff]
    %v1555 = vld [vmem:[#allocation7 + $0x198] sm:$0xff]
    %v1556 = vld [vmem:[#allocation7 + $0x1a0] sm:$0xff]
    %v1557 = vld [vmem:[#allocation7 + $0x1a8] sm:$0xff]
    %v1558 = vld [vmem:[#allocation7 + $0x1b0] sm:$0xff]
    %v1559 = vld [vmem:[#allocation7 + $0x1b8] sm:$0xff]
    %v1560 = vld [vmem:[#allocation7 + $0x1c0] sm:$0xff]
    %v1561 = vld [vmem:[#allocation7 + $0x1c8] sm:$0xff]
    %v1562 = vld [vmem:[#allocation7 + $0x1d0] sm:$0xff]
    %v1563 = vld [vmem:[#allocation7 + $0x1d8] sm:$0xff]
    %v1564 = vld [vmem:[#allocation7 + $0x1e0] sm:$0xff]
    %v1565 = vld [vmem:[#allocation7 + $0x1e8] sm:$0xff]
    %v1566 = vld [vmem:[#allocation7 + $0x1f0] sm:$0xff]
    %v1567 = vld [vmem:[#allocation7 + $0x1f8] sm:$0xff]
    %v1568 = vld [vmem:[%s6] sm:$0x3]
    %v1570 = vlaneseq
    %v1571 = vshrl.u32 %v1570, 7
    %v1572 = vsub.s32 0, %v1571
    %v1573 = vrot.slane %v1568, %v1572
    %v1574 = vlaneseq
    %v1575 = vshrl.u32 %v1574, 7
    %v1576 = vsub.s32 1, %v1575
    %v1577 = vrot.slane %v1568, %v1576
    %v1644 = vunpack.c.l.b16 %v1504
    %v1645 = vunpack.c.h.b16 %v1504
    %v1646 = vunpack.c.l.b16 %v1505
    %v1647 = vunpack.c.h.b16 %v1505
    %v1648 = vunpack.c.l.b16 %v1506
    %v1649 = vunpack.c.h.b16 %v1506
    %v1650 = vunpack.c.l.b16 %v1507
    %v1651 = vunpack.c.h.b16 %v1507
    %v1652 = vunpack.c.l.b16 %v1508
    %v1653 = vunpack.c.h.b16 %v1508
    %v1654 = vunpack.c.l.b16 %v1509
    %v1655 = vunpack.c.h.b16 %v1509
    %v1656 = vunpack.c.l.b16 %v1510
    %v1657 = vunpack.c.h.b16 %v1510
    %v1658 = vunpack.c.l.b16 %v1511
    %v1659 = vunpack.c.h.b16 %v1511
    %v1660 = vunpack.c.l.b16 %v1512
    %v1661 = vunpack.c.h.b16 %v1512
    %v1662 = vunpack.c.l.b16 %v1513
    %v1663 = vunpack.c.h.b16 %v1513
    %v1664 = vunpack.c.l.b16 %v1514
    %v1665 = vunpack.c.h.b16 %v1514
    %v1666 = vunpack.c.l.b16 %v1515
    %v1667 = vunpack.c.h.b16 %v1515
    %v1668 = vunpack.c.l.b16 %v1516
    %v1669 = vunpack.c.h.b16 %v1516
    %v1670 = vunpack.c.l.b16 %v1517
    %v1671 = vunpack.c.h.b16 %v1517
    %v1672 = vunpack.c.l.b16 %v1518
    %v1673 = vunpack.c.h.b16 %v1518
    %v1674 = vunpack.c.l.b16 %v1519
    %v1675 = vunpack.c.h.b16 %v1519
    %v1676 = vunpack.c.l.b16 %v1520
    %v1677 = vunpack.c.h.b16 %v1520
    %v1678 = vunpack.c.l.b16 %v1521
    %v1679 = vunpack.c.h.b16 %v1521
    %v1680 = vunpack.c.l.b16 %v1522
    %v1681 = vunpack.c.h.b16 %v1522
    %v1682 = vunpack.c.l.b16 %v1523
    %v1683 = vunpack.c.h.b16 %v1523
    %v1684 = vunpack.c.l.b16 %v1524
    %v1685 = vunpack.c.h.b16 %v1524
    %v1686 = vunpack.c.l.b16 %v1525
    %v1687 = vunpack.c.h.b16 %v1525
    %v1688 = vunpack.c.l.b16 %v1526
    %v1689 = vunpack.c.h.b16 %v1526
    %v1690 = vunpack.c.l.b16 %v1527
    %v1691 = vunpack.c.h.b16 %v1527
    %v1692 = vunpack.c.l.b16 %v1528
    %v1693 = vunpack.c.h.b16 %v1528
    %v1694 = vunpack.c.l.b16 %v1529
    %v1695 = vunpack.c.h.b16 %v1529
    %v1696 = vunpack.c.l.b16 %v1530
    %v1697 = vunpack.c.h.b16 %v1530
    %v1698 = vunpack.c.l.b16 %v1531
    %v1699 = vunpack.c.h.b16 %v1531
    %v1700 = vunpack.c.l.b16 %v1532
    %v1701 = vunpack.c.h.b16 %v1532
    %v1702 = vunpack.c.l.b16 %v1533
    %v1703 = vunpack.c.h.b16 %v1533
    %v1704 = vunpack.c.l.b16 %v1534
    %v1705 = vunpack.c.h.b16 %v1534
    %v1706 = vunpack.c.l.b16 %v1535
    %v1707 = vunpack.c.h.b16 %v1535
    %v1708 = vunpack.c.l.b16 %v1536
    %v1709 = vunpack.c.h.b16 %v1536
    %v1710 = vunpack.c.l.b16 %v1537
    %v1711 = vunpack.c.h.b16 %v1537
    %v1712 = vunpack.c.l.b16 %v1538
    %v1713 = vunpack.c.h.b16 %v1538
    %v1714 = vunpack.c.l.b16 %v1539
    %v1715 = vunpack.c.h.b16 %v1539
    %v1716 = vunpack.c.l.b16 %v1540
    %v1717 = vunpack.c.h.b16 %v1540
    %v1718 = vunpack.c.l.b16 %v1541
    %v1719 = vunpack.c.h.b16 %v1541
    %v1720 = vunpack.c.l.b16 %v1542
    %v1721 = vunpack.c.h.b16 %v1542
    %v1722 = vunpack.c.l.b16 %v1543
    %v1723 = vunpack.c.h.b16 %v1543
    %v1724 = vunpack.c.l.b16 %v1544
    %v1725 = vunpack.c.h.b16 %v1544
    %v1726 = vunpack.c.l.b16 %v1545
    %v1727 = vunpack.c.h.b16 %v1545
    %v1728 = vunpack.c.l.b16 %v1546
    %v1729 = vunpack.c.h.b16 %v1546
    %v1730 = vunpack.c.l.b16 %v1547
    %v1731 = vunpack.c.h.b16 %v1547
    %v1732 = vunpack.c.l.b16 %v1548
    %v1733 = vunpack.c.h.b16 %v1548
    %v1734 = vunpack.c.l.b16 %v1549
    %v1735 = vunpack.c.h.b16 %v1549
    %v1736 = vunpack.c.l.b16 %v1550
    %v1737 = vunpack.c.h.b16 %v1550
    %v1738 = vunpack.c.l.b16 %v1551
    %v1739 = vunpack.c.h.b16 %v1551
    %v1740 = vunpack.c.l.b16 %v1552
    %v1741 = vunpack.c.h.b16 %v1552
    %v1742 = vunpack.c.l.b16 %v1553
    %v1743 = vunpack.c.h.b16 %v1553
    %v1744 = vunpack.c.l.b16 %v1554
    %v1745 = vunpack.c.h.b16 %v1554
    %v1746 = vunpack.c.l.b16 %v1555
    %v1747 = vunpack.c.h.b16 %v1555
    %v1748 = vunpack.c.l.b16 %v1556
    %v1749 = vunpack.c.h.b16 %v1556
    %v1750 = vunpack.c.l.b16 %v1557
    %v1751 = vunpack.c.h.b16 %v1557
    %v1752 = vunpack.c.l.b16 %v1558
    %v1753 = vunpack.c.h.b16 %v1558
    %v1754 = vunpack.c.l.b16 %v1559
    %v1755 = vunpack.c.h.b16 %v1559
    %v1756 = vunpack.c.l.b16 %v1560
    %v1757 = vunpack.c.h.b16 %v1560
    %v1758 = vunpack.c.l.b16 %v1561
    %v1759 = vunpack.c.h.b16 %v1561
    %v1760 = vunpack.c.l.b16 %v1562
    %v1761 = vunpack.c.h.b16 %v1562
    %v1762 = vunpack.c.l.b16 %v1563
    %v1763 = vunpack.c.h.b16 %v1563
    %v1764 = vunpack.c.l.b16 %v1564
    %v1765 = vunpack.c.h.b16 %v1564
    %v1766 = vunpack.c.l.b16 %v1565
    %v1767 = vunpack.c.h.b16 %v1565
    %v1768 = vunpack.c.l.b16 %v1566
    %v1769 = vunpack.c.h.b16 %v1566
    %v1770 = vunpack.c.l.b16 %v1567
    %v1771 = vunpack.c.h.b16 %v1567
    %v1772 = vpack.c.b16 %v1646, %v1644
    %v1773 = vpack.c.b16 %v1647, %v1645
    %v1774 = vpack.c.b16 %v1650, %v1648
    %v1775 = vpack.c.b16 %v1651, %v1649
    %v1776 = vpack.c.b16 %v1654, %v1652
    %v1777 = vpack.c.b16 %v1655, %v1653
    %v1778 = vpack.c.b16 %v1658, %v1656
    %v1779 = vpack.c.b16 %v1659, %v1657
    %v1780 = vpack.c.b16 %v1662, %v1660
    %v1781 = vpack.c.b16 %v1663, %v1661
    %v1782 = vpack.c.b16 %v1666, %v1664
    %v1783 = vpack.c.b16 %v1667, %v1665
    %v1784 = vpack.c.b16 %v1670, %v1668
    %v1785 = vpack.c.b16 %v1671, %v1669
    %v1786 = vpack.c.b16 %v1674, %v1672
    %v1787 = vpack.c.b16 %v1675, %v1673
    %v1788 = vpack.c.b16 %v1678, %v1676
    %v1789 = vpack.c.b16 %v1679, %v1677
    %v1790 = vpack.c.b16 %v1682, %v1680
    %v1791 = vpack.c.b16 %v1683, %v1681
    %v1792 = vpack.c.b16 %v1686, %v1684
    %v1793 = vpack.c.b16 %v1687, %v1685
    %v1794 = vpack.c.b16 %v1690, %v1688
    %v1795 = vpack.c.b16 %v1691, %v1689
    %v1796 = vpack.c.b16 %v1694, %v1692
    %v1797 = vpack.c.b16 %v1695, %v1693
    %v1798 = vpack.c.b16 %v1698, %v1696
    %v1799 = vpack.c.b16 %v1699, %v1697
    %v1800 = vpack.c.b16 %v1702, %v1700
    %v1801 = vpack.c.b16 %v1703, %v1701
    %v1802 = vpack.c.b16 %v1706, %v1704
    %v1803 = vpack.c.b16 %v1707, %v1705
    %v1804 = vpack.c.b16 %v1710, %v1708
    %v1805 = vpack.c.b16 %v1711, %v1709
    %v1806 = vpack.c.b16 %v1714, %v1712
    %v1807 = vpack.c.b16 %v1715, %v1713
    %v1808 = vpack.c.b16 %v1718, %v1716
    %v1809 = vpack.c.b16 %v1719, %v1717
    %v1810 = vpack.c.b16 %v1722, %v1720
    %v1811 = vpack.c.b16 %v1723, %v1721
    %v1812 = vpack.c.b16 %v1726, %v1724
    %v1813 = vpack.c.b16 %v1727, %v1725
    %v1814 = vpack.c.b16 %v1730, %v1728
    %v1815 = vpack.c.b16 %v1731, %v1729
    %v1816 = vpack.c.b16 %v1734, %v1732
    %v1817 = vpack.c.b16 %v1735, %v1733
    %v1818 = vpack.c.b16 %v1738, %v1736
    %v1819 = vpack.c.b16 %v1739, %v1737
    %v1820 = vpack.c.b16 %v1742, %v1740
    %v1821 = vpack.c.b16 %v1743, %v1741
    %v1822 = vpack.c.b16 %v1746, %v1744
    %v1823 = vpack.c.b16 %v1747, %v1745
    %v1824 = vpack.c.b16 %v1750, %v1748
    %v1825 = vpack.c.b16 %v1751, %v1749
    %v1826 = vpack.c.b16 %v1754, %v1752
    %v1827 = vpack.c.b16 %v1755, %v1753
    %v1828 = vpack.c.b16 %v1758, %v1756
    %v1829 = vpack.c.b16 %v1759, %v1757
    %v1830 = vpack.c.b16 %v1762, %v1760
    %v1831 = vpack.c.b16 %v1763, %v1761
    %v1832 = vpack.c.b16 %v1766, %v1764
    %v1833 = vpack.c.b16 %v1767, %v1765
    %v1834 = vpack.c.b16 %v1770, %v1768
    %v1835 = vpack.c.b16 %v1771, %v1769
    %1900 = vmatprep.subr.bf16.mxu0 %v1773
    %1901 = vmatpush1.bf16.msra.mxu0 %v1772
    %1902 = vmatprep.subr.bf16.mxu0 %v1775
    %1903 = vmatpush1.bf16.msra.mxu0 %v1774
    %1904 = vmatprep.subr.bf16.mxu0 %v1777
    %1905 = vmatpush1.bf16.msra.mxu0 %v1776
    %1906 = vmatprep.subr.bf16.mxu0 %v1779
    %1907 = vmatpush1.bf16.msra.mxu0 %v1778
    %1908 = vmatprep.subr.bf16.mxu0 %v1781
    %1909 = vmatpush1.bf16.msra.mxu0 %v1780
    %1910 = vmatprep.subr.bf16.mxu0 %v1783
    %1911 = vmatpush1.bf16.msra.mxu0 %v1782
    %1912 = vmatprep.subr.bf16.mxu0 %v1785
    %1913 = vmatpush1.bf16.msra.mxu0 %v1784
    %1914 = vmatprep.subr.bf16.mxu0 %v1787
    %1915 = vmatpush1.bf16.msra.mxu0 %v1786
    %1916 = vmatprep.subr.bf16.mxu0 %v1789
    %1917 = vmatpush1.bf16.msra.mxu0 %v1788
    %1918 = vmatprep.subr.bf16.mxu0 %v1791
    %1919 = vmatpush1.bf16.msra.mxu0 %v1790
    %1920 = vmatprep.subr.bf16.mxu0 %v1793
    %1921 = vmatpush1.bf16.msra.mxu0 %v1792
    %1922 = vmatprep.subr.bf16.mxu0 %v1795
    %1923 = vmatpush1.bf16.msra.mxu0 %v1794
    %1924 = vmatprep.subr.bf16.mxu0 %v1797
    %1925 = vmatpush1.bf16.msra.mxu0 %v1796
    %1926 = vmatprep.subr.bf16.mxu0 %v1799
    %1927 = vmatpush1.bf16.msra.mxu0 %v1798
    %1928 = vmatprep.subr.bf16.mxu0 %v1801
    %1929 = vmatpush1.bf16.msra.mxu0 %v1800
    %1930 = vmatprep.subr.bf16.mxu0 %v1803
    %1931 = vmatpush1.bf16.msra.mxu0 %v1802
    %1932 = vmatprep.mubr.bf16.mxu0 %v1489
    %1933 = vmatmul.mubr.bf16.gmra.mrb[0].mxu0 %v1488
    %v1934 = vpop.f32.mrb[0].mxu0
    %v1935 = vadd.f32 %v1573, %v1934
    %v1936 = vpop.f32.mrb[0].mxu0
    %v1937 = vadd.f32 %v1577, %v1936
    %v1938 = vpop.f32.mrb[0].mxu0
    %v1939 = vadd.f32 %v1573, %v1938
    %v1940 = vpop.f32.mrb[0].mxu0
    %v1941 = vadd.f32 %v1577, %v1940
    %1942 = vmatprep.mubr.bf16.mxu0 %v1493
    %1943 = vmatmul.mubr.bf16.gmra.mrb[0].mxu0 %v1492
    %v1944 = vpop.f32.mrb[0].mxu0
    %v1945 = vadd.f32 %v1573, %v1944
    %v1946 = vpop.f32.mrb[0].mxu0
    %v1947 = vadd.f32 %v1577, %v1946
    %v1948 = vpop.f32.mrb[0].mxu0
    %v1949 = vadd.f32 %v1573, %v1948
    %v1950 = vpop.f32.mrb[0].mxu0
    %v1951 = vadd.f32 %v1577, %v1950
    %1952 = vmatprep.mubr.bf16.mxu0 %v1497
    %1953 = vmatmul.mubr.bf16.gmra.mrb[0].mxu0 %v1496
    %v1954 = vpop.f32.mrb[0].mxu0
    %v1955 = vadd.f32 %v1573, %v1954
    %v1956 = vpop.f32.mrb[0].mxu0
    %v1957 = vadd.f32 %v1577, %v1956
    %v1958 = vpop.f32.mrb[0].mxu0
    %v1959 = vadd.f32 %v1573, %v1958
    %v1960 = vpop.f32.mrb[0].mxu0
    %v1961 = vadd.f32 %v1577, %v1960
    %1962 = vmatprep.mubr.bf16.mxu0 %v1501
    %1963 = vmatmul.mubr.bf16.gmra.mrb[0].mxu0 %v1500
    %v1964 = vpop.f32.mrb[0].mxu0
    %v1965 = vadd.f32 %v1573, %v1964
    %v1966 = vpop.f32.mrb[0].mxu0
    %v1967 = vadd.f32 %v1577, %v1966
    %v1968 = vpop.f32.mrb[0].mxu0
    %v1969 = vadd.f32 %v1573, %v1968
    %v1970 = vpop.f32.mrb[0].mxu0
    %v1971 = vadd.f32 %v1577, %v1970
    %1972 = vdwg.mxu0
    %1973 = vmatprep.subr.bf16.mxu0 %v1805
    %1974 = vmatpush1.bf16.msra.mxu0 %v1804
    %1975 = vmatprep.subr.bf16.mxu0 %v1807
    %1976 = vmatpush1.bf16.msra.mxu0 %v1806
    %1977 = vmatprep.subr.bf16.mxu0 %v1809
    %1978 = vmatpush1.bf16.msra.mxu0 %v1808
    %1979 = vmatprep.subr.bf16.mxu0 %v1811
    %1980 = vmatpush1.bf16.msra.mxu0 %v1810
    %1981 = vmatprep.subr.bf16.mxu0 %v1813
    %1982 = vmatpush1.bf16.msra.mxu0 %v1812
    %1983 = vmatprep.subr.bf16.mxu0 %v1815
    %1984 = vmatpush1.bf16.msra.mxu0 %v1814
    %1985 = vmatprep.subr.bf16.mxu0 %v1817
    %1986 = vmatpush1.bf16.msra.mxu0 %v1816
    %1987 = vmatprep.subr.bf16.mxu0 %v1819
    %1988 = vmatpush1.bf16.msra.mxu0 %v1818
    %1989 = vmatprep.subr.bf16.mxu0 %v1821
    %1990 = vmatpush1.bf16.msra.mxu0 %v1820
    %1991 = vmatprep.subr.bf16.mxu0 %v1823
    %1992 = vmatpush1.bf16.msra.mxu0 %v1822
    %1993 = vmatprep.subr.bf16.mxu0 %v1825
    %1994 = vmatpush1.bf16.msra.mxu0 %v1824
    %1995 = vmatprep.subr.bf16.mxu0 %v1827
    %1996 = vmatpush1.bf16.msra.mxu0 %v1826
    %1997 = vmatprep.subr.bf16.mxu0 %v1829
    %1998 = vmatpush1.bf16.msra.mxu0 %v1828
    %1999 = vmatprep.subr.bf16.mxu0 %v1831
    %2000 = vmatpush1.bf16.msra.mxu0 %v1830
    %2001 = vmatprep.subr.bf16.mxu0 %v1833
    %2002 = vmatpush1.bf16.msra.mxu0 %v1832
    %2003 = vmatprep.subr.bf16.mxu0 %v1835
    %2004 = vmatpush1.bf16.msra.mxu0 %v1834
    %2005 = vmatprep.mubr.bf16.mxu0 %v1491
    %2006 = vmatmul.mubr.bf16.gmra.mrb[0].mxu0 %v1490
    %v2007 = vpop.f32.mrb[0].mxu0
    %v2008 = vadd.f32 %v1935, %v2007
    %v2009 = vpop.f32.mrb[0].mxu0
    %v2010 = vadd.f32 %v1937, %v2009
    %v2011 = vpop.f32.mrb[0].mxu0
    %v2012 = vadd.f32 %v1939, %v2011
    %v2013 = vpop.f32.mrb[0].mxu0
    %v2014 = vadd.f32 %v1941, %v2013
    %2015 = vmatprep.mubr.bf16.mxu0 %v1495
    %2016 = vmatmul.mubr.bf16.gmra.mrb[0].mxu0 %v1494
    %v2017 = vpop.f32.mrb[0].mxu0
    %v2018 = vadd.f32 %v1945, %v2017
    %v2019 = vpop.f32.mrb[0].mxu0
    %v2020 = vadd.f32 %v1947, %v2019
    %v2021 = vpop.f32.mrb[0].mxu0
    %v2022 = vadd.f32 %v1949, %v2021
    %v2023 = vpop.f32.mrb[0].mxu0
    %v2024 = vadd.f32 %v1951, %v2023
    %2025 = vmatprep.mubr.bf16.mxu0 %v1499
    %2026 = vmatmul.mubr.bf16.gmra.mrb[0].mxu0 %v1498
    %v2027 = vpop.f32.mrb[0].mxu0
    %v2028 = vadd.f32 %v1955, %v2027
    %v2029 = vpop.f32.mrb[0].mxu0
    %v2030 = vadd.f32 %v1957, %v2029
    %v2031 = vpop.f32.mrb[0].mxu0
    %v2032 = vadd.f32 %v1959, %v2031
    %v2033 = vpop.f32.mrb[0].mxu0
    %v2034 = vadd.f32 %v1961, %v2033
    %2035 = vmatprep.mubr.bf16.mxu0 %v1503
    %2036 = vmatmul.mubr.bf16.gmra.mrb[0].mxu0 %v1502
    %v2037 = vpop.f32.mrb[0].mxu0
    %v2038 = vadd.f32 %v1965, %v2037
    %v2039 = vpop.f32.mrb[0].mxu0
    %v2040 = vadd.f32 %v1967, %v2039
    %v2041 = vpop.f32.mrb[0].mxu0
    %v2042 = vadd.f32 %v1969, %v2041
    %v2043 = vpop.f32.mrb[0].mxu0
    %v2044 = vadd.f32 %v1971, %v2043
    %2045 = vdwg.mxu0
    %2046 = vst [vmem:[#allocation8] sm:$0xff] %v2008
    %2047 = vst [vmem:[#allocation8 + $0x8] sm:$0xff] %v2010
    %2048 = vst [vmem:[#allocation8 + $0x10] sm:$0xff] %v2012
    %2049 = vst [vmem:[#allocation8 + $0x18] sm:$0xff] %v2014
    %2050 = vst [vmem:[#allocation8 + $0x20] sm:$0xff] %v2018
    %2051 = vst [vmem:[#allocation8 + $0x28] sm:$0xff] %v2020
    %2052 = vst [vmem:[#allocation8 + $0x30] sm:$0xff] %v2022
    %2053 = vst [vmem:[#allocation8 + $0x38] sm:$0xff] %v2024
    %2054 = vst [vmem:[#allocation8 + $0x40] sm:$0xff] %v2028
    %2055 = vst [vmem:[#allocation8 + $0x48] sm:$0xff] %v2030
    %2056 = vst [vmem:[#allocation8 + $0x50] sm:$0xff] %v2032
    %2057 = vst [vmem:[#allocation8 + $0x58] sm:$0xff] %v2034
    %2058 = vst [vmem:[#allocation8 + $0x60] sm:$0xff] %v2038
    %2059 = vst [vmem:[#allocation8 + $0x68] sm:$0xff] %v2040
    %2060 = vst [vmem:[#allocation8 + $0x70] sm:$0xff] %v2042
    %2061 = vst [vmem:[#allocation8 + $0x78] sm:$0xff] %v2044
    // Predicated region
    $region42: #{tpu_custom_call.1} parent=1 // pred_check
      _
    $region43: #{tpu_custom_call.1} parent=1 // pred_check_branch
      %2063 = sbr.rel (0) target = $region45
    $region44: #{tpu_custom_call.1} parent=1 // pred_region
      %s2065 = ssub.s32 2048, 2048
      %2066 = vsyncadd [#allocation4], %s2065
      %s2067 = sshll.u32 [#allocation8], 4
      %s2068 = int_to_ptr.vmem [resolvable:$true] %s2067
      %2073 = dma.vmem_to_hbm [thread:$0]  %s2068, 2048, %s7, [#allocation4], 256, 256, 16
    $region45: #{tpu_custom_call.1} parent=1 // pred_fallthru
      _
    // Predicated region
    $region46: #{tpu_custom_call.1} parent=1 // pred_check
      _
    $region47: #{tpu_custom_call.1} parent=1 // pred_check_branch
      %2075 = sbr.rel (0) target = $region49
    $region48: #{tpu_custom_call.1} parent=1 // pred_region
      %2076 = dma.done [#allocation4], 2048
    $region49: #{tpu_custom_call.1} parent=1 // pred_fallthru
      _
    %2077 = vsyncpa [#allocation3], 1
    %2078 = vsyncpa [#allocation6], 1
    %2079 = vsyncpa [#allocation4], 1

</llo_original>
